<compile_context>
chip_gen: v6e
topology: v6e:2x2x1
jax: 0.10.0
libtpu: 0.0.40
codegen_flags: <defaults>
</compile_context>

<pallas_src>
import functools

import jax
import jax.numpy as jnp
from jax import lax
from jax.experimental import pallas as pl
from jax.experimental.pallas import tpu as pltpu


def mhsa_kernel(xq_ref, xkv_ref, wqkv_ref, bqkv_ref, wo_ref, bo_ref,
                o_ref, ctx_ref, *, num_heads, head_dim, q_tile):
    D = num_heads * head_dim
    t = pl.program_id(1)                       # query-tile index

    xq = xq_ref[0]                             # (TM, D)   compute dtype (bf16)
    xkv = xkv_ref[0]                           # (M,  D)   compute dtype (bf16)
    M = xkv.shape[0]
    scale = 1.0 / (head_dim ** 0.5)

    wqkv = wqkv_ref[...]                       # (D, 3D)
    bqkv = bqkv_ref[0]                         # (3D,) f32

    # Fused projections (MXU, bf16 in / f32 accumulate):
    #   queries only for this tile, K|V for the whole sequence.
    # NOTE: K/V are recomputed per query tile; fine while the number of query
    # tiles is small.  TODO(synk): flash-style KV tiling for very long M.
    q = jnp.dot(xq, wqkv[:, :D], preferred_element_type=jnp.float32) + bqkv[:D]
    kv = jnp.dot(xkv, wqkv[:, D:], preferred_element_type=jnp.float32) + bqkv[D:]
    k = kv[:, :D]                              # (M, D) f32
    v = kv[:, D:]                              # (M, D) f32

    # PyTorch mask (triu(1) + tril(-1)) == 1 off-diagonal, 0 on the diagonal.
    # Built once per tile with global query-row indices.
    qrow = lax.broadcasted_iota(jnp.int32, (q_tile, M), 0) + t * q_tile
    kcol = lax.broadcasted_iota(jnp.int32, (q_tile, M), 1)
    diag = qrow == kcol                        # (TM, M) bool

    for h in range(num_heads):                 # num_heads is small & static
        sl = slice(h * head_dim, (h + 1) * head_dim)
        qh, kh, vh = q[:, sl], k[:, sl], v[:, sl]

        # q @ k^T without materializing a transpose: contract last dims.
        s = lax.dot_general(qh, kh, (((1,), (1,)), ((), ())),
                            preferred_element_type=jnp.float32) * scale
        s = jnp.where(diag, 0.0, s)            # zero the diagonal score

        # Softmax in f32.
        s = s - jnp.max(s, axis=-1, keepdims=True)
        p = jnp.exp(s)
        inv_l = pl.reciprocal(jnp.sum(p, axis=-1, keepdims=True), approx=True)
        p = p * inv_l
        # TODO(synk): dropout on attn weights omitted (identity in eval mode).

        ctx_ref[:, sl] = jnp.dot(p, vh, preferred_element_type=jnp.float32)

    # Single fused out-projection (MXU, bf16 in / f32 accumulate).
    ctx = ctx_ref[...].astype(wo_ref.dtype)
    out = jnp.dot(ctx, wo_ref[...], preferred_element_type=jnp.float32) + bo_ref[0]
    o_ref[0] = out.astype(o_ref.dtype)


def mhsa_forward(x, params, num_heads, *, compute_dtype=jnp.bfloat16, q_tile=None):
    B, M, D = x.shape
    head_dim = D // num_heads
    wq, bq, wk, bk, wv, bv, wo, bo = params

    # Host-side fusion of the three projections into one (D, 3D) weight + bias.
    wqkv = jnp.concatenate([wq, wk, wv], axis=1).astype(compute_dtype)
    bqkv = jnp.concatenate([bq, bk, bv], axis=1).astype(jnp.float32)
    wo_c = wo.astype(compute_dtype)
    bo_c = bo.astype(jnp.float32)
    x_c = x.astype(compute_dtype)

    # Query-tile size: whole sequence for short M, 256-row tiles otherwise.
    if q_tile is None:
        q_tile = M if (M <= 256 or M % 256 != 0) else 256
    assert M % q_tile == 0, "sequence length must be divisible by the query tile"
    nq = M // q_tile

    kernel = functools.partial(mhsa_kernel, num_heads=num_heads,
                               head_dim=head_dim, q_tile=q_tile)

    def const(shape):  # weights/biases: constant block index across the grid
        return pl.BlockSpec(shape, lambda b, t: (0, 0))

    return pl.pallas_call(
        kernel,
        out_shape=jax.ShapeDtypeStruct((B, M, D), x.dtype),
        grid_spec=pltpu.PrefetchScalarGridSpec(
            num_scalar_prefetch=0,
            grid=(B, nq),
            in_specs=[
                pl.BlockSpec((1, q_tile, D), lambda b, t: (b, t, 0)),  # x (q tile)
                pl.BlockSpec((1, M, D), lambda b, t: (b, 0, 0)),       # x (full, K/V)
                const((D, 3 * D)), const((1, 3 * D)),                  # Wqkv, bqkv
                const((D, D)), const((1, D)),                          # Wo,   bo
            ],
            out_specs=pl.BlockSpec((1, q_tile, D), lambda b, t: (b, t, 0)),
            scratch_shapes=[pltpu.VMEM((q_tile, D), jnp.float32)],     # ctx
        ),
        compiler_params=pltpu.CompilerParams(
            dimension_semantics=("parallel", "parallel"),
            # Above the 32 MiB scoped default, below v7x's 64 MiB physical VMEM.
            vmem_limit_bytes=48 * 1024 * 1024,
        ),
    )(x_c, x_c, wqkv, bqkv, wo_c, bo_c)


def mhsa_reference(x, params, num_heads):
    """Pure-JAX f32 reference mirroring the PyTorch forward."""
    wq, bq, wk, bk, wv, bv, wo, bo = params
    B, M, D = x.shape
    Dh = D // num_heads

    def split(t):   # (B, M, D) -> (B, H, M, Dh)
        return t.reshape(B, M, num_heads, Dh).transpose(0, 2, 1, 3)

    q = split(x @ wq + bq[0])
    k = split(x @ wk + bk[0])
    v = split(x @ wv + bv[0])
    scores = jnp.einsum("bhmd,bhnd->bhmn", q, k) / (Dh ** 0.5)
    mask = 1.0 - jnp.eye(M, dtype=x.dtype)
    scores = scores * mask
    attn = jax.nn.softmax(scores, axis=-1)
    ctx = jnp.einsum("bhmn,bhnd->bhmd", attn, v)
    ctx = ctx.transpose(0, 2, 1, 3).reshape(B, M, D)
    return ctx @ wo + bo[0]


if __name__ == "__main__":
    B, M, D, H = 2, 8, 32, 4    # batch, seq, hidden, heads  (head_dim = 8)

    key = jax.random.PRNGKey(0)
    keys = jax.random.split(key, 9)
    x = jax.random.normal(keys[0], (B, M, D), dtype=jnp.float32)

    def init_linear(kw, kb):
        # deterministic synthetic init, roughly nn.Linear's uniform scale
        bound = 1.0 / (D ** 0.5)
        w = jax.random.uniform(kw, (D, D), jnp.float32, -bound, bound)
        b = jax.random.uniform(kb, (1, D), jnp.float32, -bound, bound)
        return w, b

    wq, bq = init_linear(keys[1], keys[2])
    wk, bk = init_linear(keys[3], keys[4])
    wv, bv = init_linear(keys[5], keys[6])
    wo, bo = init_linear(keys[7], keys[8])
    params = (wq, bq, wk, bk, wv, bv, wo, bo)

    ref = mhsa_reference(x, params, num_heads=H)

    # Recommended configuration: bf16-fed MXU, f32 accumulation / softmax.
    out_bf16 = mhsa_forward(x, params, num_heads=H, compute_dtype=jnp.bfloat16)
    out_bf16 = jax.block_until_ready(out_bf16)
    assert out_bf16.shape == (B, M, D)
    assert jnp.allclose(out_bf16, ref, atol=2e-2, rtol=2e-2), "bf16 mismatch vs reference"

    # f32 compute path: tight check that the kernel math matches the reference.
    out_f32 = mhsa_forward(x, params, num_heads=H, compute_dtype=jnp.float32)
    out_f32 = jax.block_until_ready(out_f32)
    assert jnp.allclose(out_f32, ref, atol=5e-3, rtol=5e-3), "f32 mismatch vs reference"

    print("KERNEL_OK")
</pallas_src>

<mosaic_0001>
module attributes {stable_mosaic.version = 11 : i64} {
  func.func @mhsa_kernel(%arg0: i32, %arg1: i32, %arg2: memref<1x8x32xbf16, #tpu.memory_space<vmem>>, %arg3: memref<1x8x32xbf16, #tpu.memory_space<vmem>>, %arg4: memref<32x96xbf16, #tpu.memory_space<vmem>>, %arg5: memref<1x96xf32, #tpu.memory_space<vmem>>, %arg6: memref<32x32xbf16, #tpu.memory_space<vmem>>, %arg7: memref<1x32xf32, #tpu.memory_space<vmem>>, %arg8: memref<1x8x32xf32, #tpu.memory_space<vmem>>, %arg9: memref<8x32xf32, #tpu.memory_space<vmem>>) attributes {dimension_semantics = [#tpu.dimension_semantics<parallel>, #tpu.dimension_semantics<parallel>], iteration_bounds = array<i64: 2, 1>, scalar_prefetch = 0 : i64, scratch_operands = 1 : i64, tpu.core_type = #tpu.core_type<tc>, window_params = [{transform_indices = @transform_0, window_bounds = array<i64: 1, 8, 32>}, {transform_indices = @transform_1, window_bounds = array<i64: 1, 8, 32>}, {pipeline_mode = #tpu.pipeline_mode<synchronous>, transform_indices = @transform_2, window_bounds = array<i64: 32, 96>}, {pipeline_mode = #tpu.pipeline_mode<synchronous>, transform_indices = @transform_3, window_bounds = array<i64: 1, 96>}, {pipeline_mode = #tpu.pipeline_mode<synchronous>, transform_indices = @transform_4, window_bounds = array<i64: 32, 32>}, {pipeline_mode = #tpu.pipeline_mode<synchronous>, transform_indices = @transform_5, window_bounds = array<i64: 1, 32>}, {transform_indices = @transform_6, window_bounds = array<i64: 1, 8, 32>}]} {
    %c0 = arith.constant 0 : index
    %c0_0 = arith.constant 0 : index
    %c0_1 = arith.constant 0 : index
    %0 = vector.load %arg2[%c0, %c0_0, %c0_1] : memref<1x8x32xbf16, #tpu.memory_space<vmem>>, vector<1x8x32xbf16>
    %1 = vector.shape_cast %0 : vector<1x8x32xbf16> to vector<8x32xbf16>
    %c0_2 = arith.constant 0 : index
    %c0_3 = arith.constant 0 : index
    %c0_4 = arith.constant 0 : index
    %2 = vector.load %arg3[%c0_2, %c0_3, %c0_4] : memref<1x8x32xbf16, #tpu.memory_space<vmem>>, vector<1x8x32xbf16>
    %3 = vector.shape_cast %2 : vector<1x8x32xbf16> to vector<8x32xbf16>
    %c0_5 = arith.constant 0 : index
    %c0_6 = arith.constant 0 : index
    %4 = vector.load %arg4[%c0_5, %c0_6] : memref<32x96xbf16, #tpu.memory_space<vmem>>, vector<32x96xbf16>
    %c0_7 = arith.constant 0 : index
    %c0_8 = arith.constant 0 : index
    %5 = vector.load %arg5[%c0_7, %c0_8] : memref<1x96xf32, #tpu.memory_space<vmem>>, vector<1x96xf32>
    %6 = vector.shape_cast %5 : vector<1x96xf32> to vector<96xf32>
    %7 = vector.extract_strided_slice %4 {offsets = [0, 0], sizes = [32, 32], strides = [1, 1]} : vector<32x96xbf16> to vector<32x32xbf16>
    %cst = arith.constant dense<0.000000e+00> : vector<8x32xf32>
    %8 = tpu.matmul %1, %7, %cst {dimension_numbers = #tpu.dot_dimension_numbers<[1], [0], [0], [1], [0, 0, 1, 1], [], []>} : vector<8x32xbf16>, vector<32x32xbf16>, vector<8x32xf32> -> vector<8x32xf32>
    %9 = vector.extract_strided_slice %6 {offsets = [0], sizes = [32], strides = [1]} : vector<96xf32> to vector<32xf32>
    %10 = vector.shape_cast %9 : vector<32xf32> to vector<1x32xf32>
    %11 = vector.broadcast %10 : vector<1x32xf32> to vector<8x32xf32>
    %12 = arith.addf %8, %11 : vector<8x32xf32>
    %13 = vector.extract_strided_slice %4 {offsets = [0, 32], sizes = [32, 64], strides = [1, 1]} : vector<32x96xbf16> to vector<32x64xbf16>
    %cst_9 = arith.constant dense<0.000000e+00> : vector<8x64xf32>
    %14 = tpu.matmul %3, %13, %cst_9 {dimension_numbers = #tpu.dot_dimension_numbers<[1], [0], [0], [1], [0, 0, 1, 1], [], []>} : vector<8x32xbf16>, vector<32x64xbf16>, vector<8x64xf32> -> vector<8x64xf32>
    %15 = vector.extract_strided_slice %6 {offsets = [32], sizes = [64], strides = [1]} : vector<96xf32> to vector<64xf32>
    %16 = vector.shape_cast %15 : vector<64xf32> to vector<1x64xf32>
    %17 = vector.broadcast %16 : vector<1x64xf32> to vector<8x64xf32>
    %18 = arith.addf %14, %17 : vector<8x64xf32>
    %19 = vector.extract_strided_slice %18 {offsets = [0, 0], sizes = [8, 32], strides = [1, 1]} : vector<8x64xf32> to vector<8x32xf32>
    %20 = vector.extract_strided_slice %18 {offsets = [0, 32], sizes = [8, 32], strides = [1, 1]} : vector<8x64xf32> to vector<8x32xf32>
    %21 = tpu.iota {dimensions = array<i32: 0>} : vector<8x8xi32>
    %c8_i32 = arith.constant 8 : i32
    %22 = arith.muli %arg1, %c8_i32 : i32
    %23 = vector.broadcast %22 : i32 to vector<8x8xi32>
    %24 = arith.addi %21, %23 : vector<8x8xi32>
    %25 = tpu.iota {dimensions = array<i32: 1>} : vector<8x8xi32>
    %26 = arith.cmpi eq, %24, %25 : vector<8x8xi32>
    %27 = vector.extract_strided_slice %12 {offsets = [0, 0], sizes = [8, 8], strides = [1, 1]} : vector<8x32xf32> to vector<8x8xf32>
    %28 = vector.extract_strided_slice %19 {offsets = [0, 0], sizes = [8, 8], strides = [1, 1]} : vector<8x32xf32> to vector<8x8xf32>
    %29 = vector.extract_strided_slice %20 {offsets = [0, 0], sizes = [8, 8], strides = [1, 1]} : vector<8x32xf32> to vector<8x8xf32>
    %cst_10 = arith.constant dense<0.000000e+00> : vector<8x8xf32>
    %30 = tpu.matmul %27, %28, %cst_10 {dimension_numbers = #tpu.dot_dimension_numbers<[1], [1], [0], [0], [0, 0, 1, 0], [], []>} : vector<8x8xf32>, vector<8x8xf32>, vector<8x8xf32> -> vector<8x8xf32>
    %cst_11 = arith.constant 0.353553385 : f32
    %31 = vector.broadcast %cst_11 : f32 to vector<8x8xf32>
    %32 = arith.mulf %30, %31 : vector<8x8xf32>
    %cst_12 = arith.constant 0.000000e+00 : f32
    %33 = vector.broadcast %cst_12 : f32 to vector<8x8xf32>
    %34 = arith.select %26, %33, %32 : vector<8x8xi1>, vector<8x8xf32>
    %cst_13 = arith.constant dense<0xFF800000> : vector<8xf32>
    %35 = vector.multi_reduction <maximumf>, %34, %cst_13 [1] : vector<8x8xf32> to vector<8xf32>
    %36 = vector.shape_cast %35 : vector<8xf32> to vector<8x1xf32>
    %37 = vector.broadcast %36 : vector<8x1xf32> to vector<8x8xf32>
    %38 = arith.subf %34, %37 : vector<8x8xf32>
    %39 = math.exp %38 : vector<8x8xf32>
    %cst_14 = arith.constant dense<0.000000e+00> : vector<8xf32>
    %40 = vector.multi_reduction <add>, %39, %cst_14 [1] : vector<8x8xf32> to vector<8xf32>
    %41 = vector.shape_cast %40 : vector<8xf32> to vector<8x1xf32>
    %42 = tpu.reciprocal %41 {approx = true} : vector<8x1xf32> -> vector<8x1xf32>
    %43 = vector.broadcast %42 : vector<8x1xf32> to vector<8x8xf32>
    %44 = arith.mulf %39, %43 : vector<8x8xf32>
    %cst_15 = arith.constant dense<0.000000e+00> : vector<8x8xf32>
    %45 = tpu.matmul %44, %29, %cst_15 {dimension_numbers = #tpu.dot_dimension_numbers<[1], [0], [0], [1], [0, 0, 1, 1], [], []>} : vector<8x8xf32>, vector<8x8xf32>, vector<8x8xf32> -> vector<8x8xf32>
    %c0_16 = arith.constant 0 : index
    %c0_17 = arith.constant 0 : index
    %46 = vector.load %arg9[%c0_16, %c0_17] : memref<8x32xf32, #tpu.memory_space<vmem>>, vector<8x8xf32>
    tpu.vector_store %arg9[%c0_16, %c0_17], %45 {strides = array<i32>} : memref<8x32xf32, #tpu.memory_space<vmem>>, vector<8x8xf32>,
    %47 = vector.extract_strided_slice %12 {offsets = [0, 8], sizes = [8, 8], strides = [1, 1]} : vector<8x32xf32> to vector<8x8xf32>
    %48 = vector.extract_strided_slice %19 {offsets = [0, 8], sizes = [8, 8], strides = [1, 1]} : vector<8x32xf32> to vector<8x8xf32>
    %49 = vector.extract_strided_slice %20 {offsets = [0, 8], sizes = [8, 8], strides = [1, 1]} : vector<8x32xf32> to vector<8x8xf32>
    %cst_18 = arith.constant dense<0.000000e+00> : vector<8x8xf32>
    %50 = tpu.matmul %47, %48, %cst_18 {dimension_numbers = #tpu.dot_dimension_numbers<[1], [1], [0], [0], [0, 0, 1, 0], [], []>} : vector<8x8xf32>, vector<8x8xf32>, vector<8x8xf32> -> vector<8x8xf32>
    %cst_19 = arith.constant 0.353553385 : f32
    %51 = vector.broadcast %cst_19 : f32 to vector<8x8xf32>
    %52 = arith.mulf %50, %51 : vector<8x8xf32>
    %cst_20 = arith.constant 0.000000e+00 : f32
    %53 = vector.broadcast %cst_20 : f32 to vector<8x8xf32>
    %54 = arith.select %26, %53, %52 : vector<8x8xi1>, vector<8x8xf32>
    %cst_21 = arith.constant dense<0xFF800000> : vector<8xf32>
    %55 = vector.multi_reduction <maximumf>, %54, %cst_21 [1] : vector<8x8xf32> to vector<8xf32>
    %56 = vector.shape_cast %55 : vector<8xf32> to vector<8x1xf32>
    %57 = vector.broadcast %56 : vector<8x1xf32> to vector<8x8xf32>
    %58 = arith.subf %54, %57 : vector<8x8xf32>
    %59 = math.exp %58 : vector<8x8xf32>
    %cst_22 = arith.constant dense<0.000000e+00> : vector<8xf32>
    %60 = vector.multi_reduction <add>, %59, %cst_22 [1] : vector<8x8xf32> to vector<8xf32>
    %61 = vector.shape_cast %60 : vector<8xf32> to vector<8x1xf32>
    %62 = tpu.reciprocal %61 {approx = true} : vector<8x1xf32> -> vector<8x1xf32>
    %63 = vector.broadcast %62 : vector<8x1xf32> to vector<8x8xf32>
    %64 = arith.mulf %59, %63 : vector<8x8xf32>
    %cst_23 = arith.constant dense<0.000000e+00> : vector<8x8xf32>
    %65 = tpu.matmul %64, %49, %cst_23 {dimension_numbers = #tpu.dot_dimension_numbers<[1], [0], [0], [1], [0, 0, 1, 1], [], []>} : vector<8x8xf32>, vector<8x8xf32>, vector<8x8xf32> -> vector<8x8xf32>
    %c0_24 = arith.constant 0 : index
    %c8 = arith.constant 8 : index
    %66 = vector.load %arg9[%c0_24, %c8] : memref<8x32xf32, #tpu.memory_space<vmem>>, vector<8x8xf32>
    tpu.vector_store %arg9[%c0_24, %c8], %65 {strides = array<i32>} : memref<8x32xf32, #tpu.memory_space<vmem>>, vector<8x8xf32>,
    %67 = vector.extract_strided_slice %12 {offsets = [0, 16], sizes = [8, 8], strides = [1, 1]} : vector<8x32xf32> to vector<8x8xf32>
    %68 = vector.extract_strided_slice %19 {offsets = [0, 16], sizes = [8, 8], strides = [1, 1]} : vector<8x32xf32> to vector<8x8xf32>
    %69 = vector.extract_strided_slice %20 {offsets = [0, 16], sizes = [8, 8], strides = [1, 1]} : vector<8x32xf32> to vector<8x8xf32>
    %cst_25 = arith.constant dense<0.000000e+00> : vector<8x8xf32>
    %70 = tpu.matmul %67, %68, %cst_25 {dimension_numbers = #tpu.dot_dimension_numbers<[1], [1], [0], [0], [0, 0, 1, 0], [], []>} : vector<8x8xf32>, vector<8x8xf32>, vector<8x8xf32> -> vector<8x8xf32>
    %cst_26 = arith.constant 0.353553385 : f32
    %71 = vector.broadcast %cst_26 : f32 to vector<8x8xf32>
    %72 = arith.mulf %70, %71 : vector<8x8xf32>
    %cst_27 = arith.constant 0.000000e+00 : f32
    %73 = vector.broadcast %cst_27 : f32 to vector<8x8xf32>
    %74 = arith.select %26, %73, %72 : vector<8x8xi1>, vector<8x8xf32>
    %cst_28 = arith.constant dense<0xFF800000> : vector<8xf32>
    %75 = vector.multi_reduction <maximumf>, %74, %cst_28 [1] : vector<8x8xf32> to vector<8xf32>
    %76 = vector.shape_cast %75 : vector<8xf32> to vector<8x1xf32>
    %77 = vector.broadcast %76 : vector<8x1xf32> to vector<8x8xf32>
    %78 = arith.subf %74, %77 : vector<8x8xf32>
    %79 = math.exp %78 : vector<8x8xf32>
    %cst_29 = arith.constant dense<0.000000e+00> : vector<8xf32>
    %80 = vector.multi_reduction <add>, %79, %cst_29 [1] : vector<8x8xf32> to vector<8xf32>
    %81 = vector.shape_cast %80 : vector<8xf32> to vector<8x1xf32>
    %82 = tpu.reciprocal %81 {approx = true} : vector<8x1xf32> -> vector<8x1xf32>
    %83 = vector.broadcast %82 : vector<8x1xf32> to vector<8x8xf32>
    %84 = arith.mulf %79, %83 : vector<8x8xf32>
    %cst_30 = arith.constant dense<0.000000e+00> : vector<8x8xf32>
    %85 = tpu.matmul %84, %69, %cst_30 {dimension_numbers = #tpu.dot_dimension_numbers<[1], [0], [0], [1], [0, 0, 1, 1], [], []>} : vector<8x8xf32>, vector<8x8xf32>, vector<8x8xf32> -> vector<8x8xf32>
    %c0_31 = arith.constant 0 : index
    %c16 = arith.constant 16 : index
    %86 = vector.load %arg9[%c0_31, %c16] : memref<8x32xf32, #tpu.memory_space<vmem>>, vector<8x8xf32>
    tpu.vector_store %arg9[%c0_31, %c16], %85 {strides = array<i32>} : memref<8x32xf32, #tpu.memory_space<vmem>>, vector<8x8xf32>,
    %87 = vector.extract_strided_slice %12 {offsets = [0, 24], sizes = [8, 8], strides = [1, 1]} : vector<8x32xf32> to vector<8x8xf32>
    %88 = vector.extract_strided_slice %19 {offsets = [0, 24], sizes = [8, 8], strides = [1, 1]} : vector<8x32xf32> to vector<8x8xf32>
    %89 = vector.extract_strided_slice %20 {offsets = [0, 24], sizes = [8, 8], strides = [1, 1]} : vector<8x32xf32> to vector<8x8xf32>
    %cst_32 = arith.constant dense<0.000000e+00> : vector<8x8xf32>
    %90 = tpu.matmul %87, %88, %cst_32 {dimension_numbers = #tpu.dot_dimension_numbers<[1], [1], [0], [0], [0, 0, 1, 0], [], []>} : vector<8x8xf32>, vector<8x8xf32>, vector<8x8xf32> -> vector<8x8xf32>
    %cst_33 = arith.constant 0.353553385 : f32
    %91 = vector.broadcast %cst_33 : f32 to vector<8x8xf32>
    %92 = arith.mulf %90, %91 : vector<8x8xf32>
    %cst_34 = arith.constant 0.000000e+00 : f32
    %93 = vector.broadcast %cst_34 : f32 to vector<8x8xf32>
    %94 = arith.select %26, %93, %92 : vector<8x8xi1>, vector<8x8xf32>
    %cst_35 = arith.constant dense<0xFF800000> : vector<8xf32>
    %95 = vector.multi_reduction <maximumf>, %94, %cst_35 [1] : vector<8x8xf32> to vector<8xf32>
    %96 = vector.shape_cast %95 : vector<8xf32> to vector<8x1xf32>
    %97 = vector.broadcast %96 : vector<8x1xf32> to vector<8x8xf32>
    %98 = arith.subf %94, %97 : vector<8x8xf32>
    %99 = math.exp %98 : vector<8x8xf32>
    %cst_36 = arith.constant dense<0.000000e+00> : vector<8xf32>
    %100 = vector.multi_reduction <add>, %99, %cst_36 [1] : vector<8x8xf32> to vector<8xf32>
    %101 = vector.shape_cast %100 : vector<8xf32> to vector<8x1xf32>
    %102 = tpu.reciprocal %101 {approx = true} : vector<8x1xf32> -> vector<8x1xf32>
    %103 = vector.broadcast %102 : vector<8x1xf32> to vector<8x8xf32>
    %104 = arith.mulf %99, %103 : vector<8x8xf32>
    %cst_37 = arith.constant dense<0.000000e+00> : vector<8x8xf32>
    %105 = tpu.matmul %104, %89, %cst_37 {dimension_numbers = #tpu.dot_dimension_numbers<[1], [0], [0], [1], [0, 0, 1, 1], [], []>} : vector<8x8xf32>, vector<8x8xf32>, vector<8x8xf32> -> vector<8x8xf32>
    %c0_38 = arith.constant 0 : index
    %c24 = arith.constant 24 : index
    %106 = vector.load %arg9[%c0_38, %c24] : memref<8x32xf32, #tpu.memory_space<vmem>>, vector<8x8xf32>
    tpu.vector_store %arg9[%c0_38, %c24], %105 {strides = array<i32>} : memref<8x32xf32, #tpu.memory_space<vmem>>, vector<8x8xf32>,
    %c0_39 = arith.constant 0 : index
    %c0_40 = arith.constant 0 : index
    %107 = vector.load %arg9[%c0_39, %c0_40] : memref<8x32xf32, #tpu.memory_space<vmem>>, vector<8x32xf32>
    %108 = arith.truncf %107 : vector<8x32xf32> to vector<8x32xbf16>
    %c0_41 = arith.constant 0 : index
    %c0_42 = arith.constant 0 : index
    %109 = vector.load %arg6[%c0_41, %c0_42] : memref<32x32xbf16, #tpu.memory_space<vmem>>, vector<32x32xbf16>
    %cst_43 = arith.constant dense<0.000000e+00> : vector<8x32xf32>
    %110 = tpu.matmul %108, %109, %cst_43 {dimension_numbers = #tpu.dot_dimension_numbers<[1], [0], [0], [1], [0, 0, 1, 1], [], []>} : vector<8x32xbf16>, vector<32x32xbf16>, vector<8x32xf32> -> vector<8x32xf32>
    %c0_44 = arith.constant 0 : index
    %c0_45 = arith.constant 0 : index
    %111 = vector.load %arg7[%c0_44, %c0_45] : memref<1x32xf32, #tpu.memory_space<vmem>>, vector<1x32xf32>
    %112 = vector.shape_cast %111 : vector<1x32xf32> to vector<32xf32>
    %113 = vector.shape_cast %112 : vector<32xf32> to vector<1x32xf32>
    %114 = vector.broadcast %113 : vector<1x32xf32> to vector<8x32xf32>
    %115 = arith.addf %110, %114 : vector<8x32xf32>
    %c0_46 = arith.constant 0 : index
    %c0_47 = arith.constant 0 : index
    %c0_48 = arith.constant 0 : index
    %116 = vector.load %arg8[%c0_46, %c0_47, %c0_48] : memref<1x8x32xf32, #tpu.memory_space<vmem>>, vector<1x8x32xf32>
    %117 = vector.shape_cast %116 : vector<1x8x32xf32> to vector<8x32xf32>
    %118 = vector.shape_cast %115 : vector<8x32xf32> to vector<1x8x32xf32>
    tpu.vector_store %arg8[%c0_46, %c0_47, %c0_48], %118 {strides = array<i32>} : memref<1x8x32xf32, #tpu.memory_space<vmem>>, vector<1x8x32xf32>,
    return
  }
  func.func @transform_0(%arg0: i32, %arg1: i32) -> (i32, i32, i32) {
    %c0_i32 = arith.constant 0 : i32
    %c0_i32_0 = arith.constant 0 : i32
    return %arg0, %arg1, %c0_i32 : i32, i32, i32
  }
  func.func @transform_1(%arg0: i32, %arg1: i32) -> (i32, i32, i32) {
    %c0_i32 = arith.constant 0 : i32
    %c0_i32_0 = arith.constant 0 : i32
    %c0_i32_1 = arith.constant 0 : i32
    return %arg0, %c0_i32, %c0_i32_0 : i32, i32, i32
  }
  func.func @transform_2(%arg0: i32, %arg1: i32) -> (i32, i32) {
    %c0_i32 = arith.constant 0 : i32
    %c0_i32_0 = arith.constant 0 : i32
    %c0_i32_1 = arith.constant 0 : i32
    return %c0_i32, %c0_i32_0 : i32, i32
  }
  func.func @transform_3(%arg0: i32, %arg1: i32) -> (i32, i32) {
    %c0_i32 = arith.constant 0 : i32
    %c0_i32_0 = arith.constant 0 : i32
    %c0_i32_1 = arith.constant 0 : i32
    return %c0_i32, %c0_i32_0 : i32, i32
  }
  func.func @transform_4(%arg0: i32, %arg1: i32) -> (i32, i32) {
    %c0_i32 = arith.constant 0 : i32
    %c0_i32_0 = arith.constant 0 : i32
    %c0_i32_1 = arith.constant 0 : i32
    return %c0_i32, %c0_i32_0 : i32, i32
  }
  func.func @transform_5(%arg0: i32, %arg1: i32) -> (i32, i32) {
    %c0_i32 = arith.constant 0 : i32
    %c0_i32_0 = arith.constant 0 : i32
    %c0_i32_1 = arith.constant 0 : i32
    return %c0_i32, %c0_i32_0 : i32, i32
  }
  func.func @transform_6(%arg0: i32, %arg1: i32) -> (i32, i32, i32) {
    %c0_i32 = arith.constant 0 : i32
    %c0_i32_0 = arith.constant 0 : i32
    return %arg0, %arg1, %c0_i32 : i32, i32, i32
  }
}

</mosaic_0001>

<llo_original>
// kernel: tpu_custom_call.1
$region0: #{tpu_custom_call.1}
  #allocation0 [shape = 'u32[]', space=smem, size = 0x4, offset = 0x4, fixed_abs, tag = 'smem constant byte address 0x4 - core index']
  #allocation1 [shape = 'u32[144,128]{1,0:T(1,128)}', space=vmem, size = 0x12000, scoped, tag = 'internal scratch']
  #allocation2 [shape = 'f32[8,32]{1,0:T(8,128)}', space=vmem, size = 0x1000, scoped, tag = 'scratch operand']
  %s0 = inlined_call_operand.hbm [shape: bf16[2,8,32], index: 0, kind: input, shape index: {}]
  %s1 = inlined_call_operand.hbm [shape: bf16[2,8,32], index: 1, kind: input, shape index: {}]
  %s2 = inlined_call_operand.hbm [shape: bf16[32,96], index: 2, kind: input, shape index: {}]
  %s3 = inlined_call_operand.vmem [shape: f32[1,96], index: 3, kind: input, shape index: {}]
  %s4 = inlined_call_operand.hbm [shape: bf16[32,32], index: 4, kind: input, shape index: {}]
  %s5 = inlined_call_operand.vmem [shape: f32[1,32], index: 5, kind: input, shape index: {}]
  %s6 = inlined_call_operand.hbm [shape: f32[2,8,32], index: 6, kind: output, shape index: {}]
  %s7 = sld [smem:[#allocation0]]
  $region73: #{tpu_custom_call.1} parent=0
    _
  %s9 = ssub.s32 1, %s7
  %s10 = scalar_select 0, %s9, %s7
  $region1: #{tpu_custom_call.1} parent=0
    #allocation3 [shape = 'u8[4096]{0}', space=vmem, size = 0x1000, scoped, tag = 'input window, operand 0']
    #allocation4 [shape = 's32[2]{0}', space=sflag, size = 0x8, scoped, tag = 'scoped memory for tpu_custom_call.1']
    #allocation5 [shape = 's32[2]{0}', space=sflag, size = 0x8, scoped, tag = 'scoped memory for tpu_custom_call.1']
    #allocation6 [shape = 'u8[4096]{0}', space=vmem, size = 0x1000, scoped, tag = 'input window, operand 1']
    #allocation7 [shape = 's32[2]{0}', space=sflag, size = 0x8, scoped, tag = 'scoped memory for tpu_custom_call.1']
    #allocation8 [shape = 'u8[8192]{0}', space=vmem, size = 0x2000, scoped, tag = 'input window, operand 2, single buffered']
    #allocation9 [shape = 'u8[8192]{0}', space=vmem, size = 0x2000, scoped, tag = 'input window, operand 4, single buffered']
    #allocation10 [shape = 's32[1]{0}', space=sflag, size = 0x4, scoped, tag = 'scoped memory for tpu_custom_call.1']
    #allocation11 [shape = 'u8[8192]{0}', space=vmem, size = 0x2000, scoped, tag = 'output window, operand 0']
    %11 = vsyncpa [#allocation4], 0
    %s12 = scalar_lea.sflag [#allocation4], 1
    %13 = vsyncpa %s12, 0
    %14 = vsyncpa [#allocation7], 0
    %s15 = scalar_lea.sflag [#allocation7], 1
    %16 = vsyncpa %s15, 0
    %17 = vsyncpa [#allocation10], 0
    %18 = vsyncpa [#allocation5], 0
    %s19 = scalar_lea.sflag [#allocation5], 1
    %20 = vsyncpa %s19, 0
    loop: start=0, step=1, limit=4
    $region2: #{tpu_custom_call.1} parent=1 // loop_pre_header
      _
    $region3: #{tpu_custom_call.1} parent=1 // loop_header
      %s22 = sphi 0, %s26
      %p23 = scmp.ge.s32.totalorder %s22, 4
      %s29 = sphi 0, %s41
      %s30 = sphi 0, %s37
      %s31 = sphi 0, %s29
      %s32 = sphi 0, %s30
      %s33 = sphi 0, %s31
      %s34 = sphi 0, %s32
      %s46 = sphi 0, %s48
      %s49 = sphi 0, %s46
      %s50 = sphi 0, %s49
      %s66 = sphi 0, %s50
      %s72 = sphi 0, %s74
      %s75 = sphi 0, %s72
      %s76 = sphi 0, %s75
      %s92 = sphi 0, %s76
      %s96 = sphi 0, %s96
      %s98 = sphi 0, %s96
      %s99 = sphi 0, %s98
      %s113 = sphi 0, %s99
      %s117 = sphi 0, %s117
      %s119 = sphi 0, %s117
      %s120 = sphi 0, %s119
      %s134 = sphi 0, %s120
      %s138 = sphi 0, %s138
      %s140 = sphi 0, %s138
      %s141 = sphi 0, %s140
      %s155 = sphi 0, %s141
      %s159 = sphi 0, %s159
      %s161 = sphi 0, %s159
      %s162 = sphi 0, %s161
      %s176 = sphi 0, %s162
      %s184 = sphi 0, %s186
      %s187 = sphi 0, %s184
      %s188 = sphi 0, %s187
      %s204 = sphi 0, %s188
    $region4: #{tpu_custom_call.1} parent=1 // loop_header_branch
      %25 = sbr.rel (%p23) target = $region8
    $region5: #{tpu_custom_call.1} parent=1 // loop_body
      %s27 = ssub.s32 %s22, 1
      %s28 = ssub.s32 %s22, 2
      %s35 = sadd.s32 1, %s30
      %p36 = scmp.ge.s32.totalorder %s35, 1
      %s37 = scalar_select %p36, 0, %s35
      %s38 = sadd.s32 1, %s29
      %s39 = scalar_select %p36, %s38, %s29
      %p40 = scmp.ge.s32.totalorder %s39, 2
      %s41 = scalar_select %p40, 0, %s39
      %s42 = ssub.s32 %s29, %s41
      %s43 = ssub.s32 %s30, %s37
      %s44 = sor.u32 %s42, %s43
      %p45 = scmp.eq.s32.totalorder %s44, 0
      %s47 = sadd.s32 %s46, 1
      %s48 = scalar_select %p45, %s46, %s47
      %p51 = pneg %p45
      %p52 = scmp.eq.s32.totalorder %s22, 1
      %p53 = por %p51, %p52
      %p54 = scmp.ne.s32.totalorder %s46, %s49
      %p55 = scmp.eq.s32.totalorder %s22, 0
      %p56 = por %p54, %p55
      %p57 = scmp.ne.s32.totalorder %s46, %s49
      %p58 = scmp.eq.s32.totalorder %s27, 1
      %p59 = por %p57, %p58
      %p60 = scmp.ne.s32.totalorder %s49, %s50
      %p61 = scmp.eq.s32.totalorder %s27, 0
      %p62 = por %p60, %p61
      %p63 = scmp.ne.s32.totalorder %s49, %s50
      %p64 = scmp.eq.s32.totalorder %s28, 1
      %p65 = por %p63, %p64
      %p67 = scmp.ne.s32.totalorder %s50, %s66
      %p68 = scmp.eq.s32.totalorder %s28, 0
      %p69 = por %p67, %p68
      %s70 = ssub.s32 %s29, %s41
      %p71 = scmp.eq.s32.totalorder %s70, 0
      %s73 = sadd.s32 %s72, 1
      %s74 = scalar_select %p71, %s72, %s73
      %p77 = pneg %p71
      %p78 = scmp.eq.s32.totalorder %s22, 1
      %p79 = por %p77, %p78
      %p80 = scmp.ne.s32.totalorder %s72, %s75
      %p81 = scmp.eq.s32.totalorder %s22, 0
      %p82 = por %p80, %p81
      %p83 = scmp.ne.s32.totalorder %s72, %s75
      %p84 = scmp.eq.s32.totalorder %s27, 1
      %p85 = por %p83, %p84
      %p86 = scmp.ne.s32.totalorder %s75, %s76
      %p87 = scmp.eq.s32.totalorder %s27, 0
      %p88 = por %p86, %p87
      %p89 = scmp.ne.s32.totalorder %s75, %s76
      %p90 = scmp.eq.s32.totalorder %s28, 1
      %p91 = por %p89, %p90
      %p93 = scmp.ne.s32.totalorder %s76, %s92
      %p94 = scmp.eq.s32.totalorder %s28, 0
      %p95 = por %p93, %p94
      %s97 = sadd.s32 %s96, 1
      %p100 = scmp.eq.s32.totalorder %s22, 1
      %p101 = scmp.ne.s32.totalorder %s96, %s98
      %p102 = scmp.eq.s32.totalorder %s22, 0
      %p103 = por %p101, %p102
      %p104 = scmp.ne.s32.totalorder %s96, %s98
      %p105 = scmp.eq.s32.totalorder %s27, 1
      %p106 = por %p104, %p105
      %p107 = scmp.ne.s32.totalorder %s98, %s99
      %p108 = scmp.eq.s32.totalorder %s27, 0
      %p109 = por %p107, %p108
      %p110 = scmp.ne.s32.totalorder %s98, %s99
      %p111 = scmp.eq.s32.totalorder %s28, 1
      %p112 = por %p110, %p111
      %p114 = scmp.ne.s32.totalorder %s99, %s113
      %p115 = scmp.eq.s32.totalorder %s28, 0
      %p116 = por %p114, %p115
      %s118 = sadd.s32 %s117, 1
      %p121 = scmp.eq.s32.totalorder %s22, 1
      %p122 = scmp.ne.s32.totalorder %s117, %s119
      %p123 = scmp.eq.s32.totalorder %s22, 0
      %p124 = por %p122, %p123
      %p125 = scmp.ne.s32.totalorder %s117, %s119
      %p126 = scmp.eq.s32.totalorder %s27, 1
      %p127 = por %p125, %p126
      %p128 = scmp.ne.s32.totalorder %s119, %s120
      %p129 = scmp.eq.s32.totalorder %s27, 0
      %p130 = por %p128, %p129
      %p131 = scmp.ne.s32.totalorder %s119, %s120
      %p132 = scmp.eq.s32.totalorder %s28, 1
      %p133 = por %p131, %p132
      %p135 = scmp.ne.s32.totalorder %s120, %s134
      %p136 = scmp.eq.s32.totalorder %s28, 0
      %p137 = por %p135, %p136
      %s139 = sadd.s32 %s138, 1
      %p142 = scmp.eq.s32.totalorder %s22, 1
      %p143 = scmp.ne.s32.totalorder %s138, %s140
      %p144 = scmp.eq.s32.totalorder %s22, 0
      %p145 = por %p143, %p144
      %p146 = scmp.ne.s32.totalorder %s138, %s140
      %p147 = scmp.eq.s32.totalorder %s27, 1
      %p148 = por %p146, %p147
      %p149 = scmp.ne.s32.totalorder %s140, %s141
      %p150 = scmp.eq.s32.totalorder %s27, 0
      %p151 = por %p149, %p150
      %p152 = scmp.ne.s32.totalorder %s140, %s141
      %p153 = scmp.eq.s32.totalorder %s28, 1
      %p154 = por %p152, %p153
      %p156 = scmp.ne.s32.totalorder %s141, %s155
      %p157 = scmp.eq.s32.totalorder %s28, 0
      %p158 = por %p156, %p157
      %s160 = sadd.s32 %s159, 1
      %p163 = scmp.eq.s32.totalorder %s22, 1
      %p164 = scmp.ne.s32.totalorder %s159, %s161
      %p165 = scmp.eq.s32.totalorder %s22, 0
      %p166 = por %p164, %p165
      %p167 = scmp.ne.s32.totalorder %s159, %s161
      %p168 = scmp.eq.s32.totalorder %s27, 1
      %p169 = por %p167, %p168
      %p170 = scmp.ne.s32.totalorder %s161, %s162
      %p171 = scmp.eq.s32.totalorder %s27, 0
      %p172 = por %p170, %p171
      %p173 = scmp.ne.s32.totalorder %s161, %s162
      %p174 = scmp.eq.s32.totalorder %s28, 1
      %p175 = por %p173, %p174
      %p177 = scmp.ne.s32.totalorder %s162, %s176
      %p178 = scmp.eq.s32.totalorder %s28, 0
      %p179 = por %p177, %p178
      %s180 = ssub.s32 %s29, %s41
      %s181 = ssub.s32 %s30, %s37
      %s182 = sor.u32 %s180, %s181
      %p183 = scmp.eq.s32.totalorder %s182, 0
      %s185 = sadd.s32 %s184, 1
      %s186 = scalar_select %p183, %s184, %s185
      %p189 = pneg %p183
      %p190 = scmp.eq.s32.totalorder %s22, 1
      %p191 = por %p189, %p190
      %p192 = scmp.ne.s32.totalorder %s184, %s187
      %p193 = scmp.eq.s32.totalorder %s22, 0
      %p194 = por %p192, %p193
      %p195 = scmp.ne.s32.totalorder %s184, %s187
      %p196 = scmp.eq.s32.totalorder %s27, 1
      %p197 = por %p195, %p196
      %p198 = scmp.ne.s32.totalorder %s187, %s188
      %p199 = scmp.eq.s32.totalorder %s27, 0
      %p200 = por %p198, %p199
      %p201 = scmp.ne.s32.totalorder %s187, %s188
      %p202 = scmp.eq.s32.totalorder %s28, 1
      %p203 = por %p201, %p202
      %p205 = scmp.ne.s32.totalorder %s188, %s204
      %p206 = scmp.eq.s32.totalorder %s28, 0
      %p207 = por %p205, %p206
      %p208 = scmp.le.s32.totalorder 1, %s22
      %p209 = scmp.lt.s32.totalorder %s22, 3
      %p210 = pnand %p208, %p209
      %p211 = pneg %p210
      // Predicated region
      $region9: #{tpu_custom_call.1} parent=5 // pred_check
        _
      $region10: #{tpu_custom_call.1} parent=5 // pred_check_branch
        %213 = sbr.rel (%p210) target = $region12
      $region11: #{tpu_custom_call.1} parent=5 // pred_region
        %s214 = ssub.s32 %s22, 1
        // Predicated region
        $region13: #{tpu_custom_call.1} parent=11 // pred_check
          %p215 = pneg %p109
        $region14: #{tpu_custom_call.1} parent=11 // pred_check_branch
          %217 = sbr.rel (%p215) target = $region16
        $region15: #{tpu_custom_call.1} parent=11 // pred_region
          %s219 = ssub.s32 256, 256
          %220 = vsyncadd [#allocation7], %s219
          %s221 = sshll.u32 [#allocation8], 4
          %s222 = int_to_ptr.vmem [resolvable:$true] %s221
          %227 = dma.hbm_to_vmem [thread:$0]  %s2, 256, %s222, [#allocation7], 64, 64, 4
        $region16: #{tpu_custom_call.1} parent=11 // pred_fallthru
          _
        // Predicated region
        $region17: #{tpu_custom_call.1} parent=11 // pred_check
          %p228 = pneg %p130
        $region18: #{tpu_custom_call.1} parent=11 // pred_check_branch
          %230 = sbr.rel (%p228) target = $region20
        $region19: #{tpu_custom_call.1} parent=11 // pred_region
          _
        $region20: #{tpu_custom_call.1} parent=11 // pred_fallthru
          _
        // Predicated region
        $region21: #{tpu_custom_call.1} parent=11 // pred_check
          %p231 = pneg %p151
        $region22: #{tpu_custom_call.1} parent=11 // pred_check_branch
          %233 = sbr.rel (%p231) target = $region24
        $region23: #{tpu_custom_call.1} parent=11 // pred_region
          %s235 = ssub.s32 256, 256
          %236 = vsyncadd [#allocation10], %s235
          %s237 = sshll.u32 [#allocation9], 4
          %s238 = int_to_ptr.vmem [resolvable:$true] %s237
          %243 = dma.hbm_to_vmem [thread:$0]  %s4, 256, %s238, [#allocation10], 64, 64, 4
        $region24: #{tpu_custom_call.1} parent=11 // pred_fallthru
          _
        // Predicated region
        $region25: #{tpu_custom_call.1} parent=11 // pred_check
          %p244 = pneg %p172
        $region26: #{tpu_custom_call.1} parent=11 // pred_check_branch
          %246 = sbr.rel (%p244) target = $region28
        $region27: #{tpu_custom_call.1} parent=11 // pred_region
          _
        $region28: #{tpu_custom_call.1} parent=11 // pred_fallthru
          _
      $region12: #{tpu_custom_call.1} parent=5 // pred_fallthru
        _
      %p247 = scmp.lt.s32.totalorder %s22, 2
      // Predicated region
      $region29: #{tpu_custom_call.1} parent=5 // pred_check
        %p248 = pneg %p247
      $region30: #{tpu_custom_call.1} parent=5 // pred_check_branch
        %250 = sbr.rel (%p248) target = $region32
      $region31: #{tpu_custom_call.1} parent=5 // pred_region
        // Predicated region
        $region33: #{tpu_custom_call.1} parent=31 // pred_check
          %p251 = pneg %p56
        $region34: #{tpu_custom_call.1} parent=31 // pred_check_branch
          %253 = sbr.rel (%p251) target = $region36
        $region35: #{tpu_custom_call.1} parent=31 // pred_region
          %s254 = sand.u32 %s46, 1
          %s255 = scalar_lea.sflag [#allocation4], %s254
          %s256 = sand.u32 %s46, 1
          %s257 = smul.addr %s256, 4
          %s258 = scalar_lea.vmem [#allocation3], %s257
          %s260 = ssub.s32 64, 64
          %261 = vsyncadd %s255, %s260
          %s262 = sadd.s32 %s30, %s29
          %s263 = smul.addr %s262, 64
          %s264 = scalar_lea.hbm %s0, %s263
          %s266 = sshll.u32 %s258, 4
          %s267 = int_to_ptr.vmem [resolvable:$true] %s266
          %269 = dma.hbm_to_vmem [thread:$0]  %s264, 64, %s267, %s255
        $region36: #{tpu_custom_call.1} parent=31 // pred_fallthru
          _
        // Predicated region
        $region37: #{tpu_custom_call.1} parent=31 // pred_check
          %p270 = pneg %p82
        $region38: #{tpu_custom_call.1} parent=31 // pred_check_branch
          %272 = sbr.rel (%p270) target = $region40
        $region39: #{tpu_custom_call.1} parent=31 // pred_region
          %s273 = sand.u32 %s22, 1
          %s274 = scalar_lea.sflag [#allocation7], %s273
          %s275 = sand.u32 %s72, 1
          %s276 = smul.addr %s275, 4
          %s277 = scalar_lea.vmem [#allocation6], %s276
          %s279 = ssub.s32 64, 64
          %280 = vsyncadd %s274, %s279
          %s281 = smul.addr %s29, 64
          %s282 = scalar_lea.hbm %s1, %s281
          %s284 = sshll.u32 %s277, 4
          %s285 = int_to_ptr.vmem [resolvable:$true] %s284
          %287 = dma.hbm_to_vmem [thread:$0]  %s282, 64, %s285, %s274
        $region40: #{tpu_custom_call.1} parent=31 // pred_fallthru
          _
      $region32: #{tpu_custom_call.1} parent=5 // pred_fallthru
        _
      %p288 = scmp.le.s32.totalorder 1, %s22
      %p289 = scmp.lt.s32.totalorder %s22, 3
      %p290 = pnand %p288, %p289
      %p291 = pneg %p290
      // Predicated region
      $region41: #{tpu_custom_call.1} parent=5 // pred_check
        _
      $region42: #{tpu_custom_call.1} parent=5 // pred_check_branch
        %293 = sbr.rel (%p290) target = $region44
      $region43: #{tpu_custom_call.1} parent=5 // pred_region
        %s294 = ssub.s32 %s22, 1
        %s295 = sand.u32 %s49, 1
        %s296 = scalar_lea.sflag [#allocation4], %s295
        %s297 = sand.u32 %s49, 1
        %s298 = smul.addr %s297, 4
        %s299 = scalar_lea.vmem [#allocation3], %s298
        // Predicated region
        $region45: #{tpu_custom_call.1} parent=43 // pred_check
          %p300 = pneg %p62
        $region46: #{tpu_custom_call.1} parent=43 // pred_check_branch
          %302 = sbr.rel (%p300) target = $region48
        $region47: #{tpu_custom_call.1} parent=43 // pred_region
          %303 = dma.done %s296, 64
        $region48: #{tpu_custom_call.1} parent=43 // pred_fallthru
          _
        %s304 = sand.u32 %s27, 1
        %s305 = scalar_lea.sflag [#allocation7], %s304
        %s306 = sand.u32 %s75, 1
        %s307 = smul.addr %s306, 4
        %s308 = scalar_lea.vmem [#allocation6], %s307
        // Predicated region
        $region49: #{tpu_custom_call.1} parent=43 // pred_check
          %p309 = pneg %p88
        $region50: #{tpu_custom_call.1} parent=43 // pred_check_branch
          %311 = sbr.rel (%p309) target = $region52
        $region51: #{tpu_custom_call.1} parent=43 // pred_region
          %312 = dma.done %s305, 64
        $region52: #{tpu_custom_call.1} parent=43 // pred_fallthru
          _
        // Predicated region
        $region53: #{tpu_custom_call.1} parent=43 // pred_check
          %p313 = pneg %p109
        $region54: #{tpu_custom_call.1} parent=43 // pred_check_branch
          %315 = sbr.rel (%p313) target = $region56
        $region55: #{tpu_custom_call.1} parent=43 // pred_region
          %316 = dma.done [#allocation7], 256
        $region56: #{tpu_custom_call.1} parent=43 // pred_fallthru
          _
        // Predicated region
        $region57: #{tpu_custom_call.1} parent=43 // pred_check
          %p317 = pneg %p151
        $region58: #{tpu_custom_call.1} parent=43 // pred_check_branch
          %319 = sbr.rel (%p317) target = $region60
        $region59: #{tpu_custom_call.1} parent=43 // pred_region
          %320 = dma.done [#allocation10], 256
        $region60: #{tpu_custom_call.1} parent=43 // pred_fallthru
          _
        %s321 = sand.u32 %s49, 1
        %s322 = scalar_lea.sflag [#allocation4], %s321
        %s323 = sand.u32 %s49, 1
        %s324 = smul.addr %s323, 4
        %s325 = scalar_lea.vmem [#allocation3], %s324
        %p326 = pneg %p62
        %p327 = pneg %p59
        %s328 = sand.u32 %s27, 1
        %s329 = scalar_lea.sflag [#allocation7], %s328
        %s330 = sand.u32 %s75, 1
        %s331 = smul.addr %s330, 4
        %s332 = scalar_lea.vmem [#allocation6], %s331
        %p333 = pneg %p88
        %p334 = pneg %p85
        %p335 = pneg %p109
        %p336 = pneg %p106
        %p337 = pneg %p130
        %p338 = pneg %p127
        %p339 = pneg %p151
        %p340 = pneg %p148
        %p341 = pneg %p172
        %p342 = pneg %p169
        %p343 = pneg %p200
        %p344 = pneg %p197
        %s345 = sand.u32 %s187, 1
        %s346 = scalar_lea.sflag [#allocation5], %s345
        %s347 = sand.u32 %s187, 1
        %s348 = smul.addr %s347, 8
        %s349 = scalar_lea.vmem [#allocation11], %s348
        %v351 = vld [vmem:[%s299] sm:$0xf]
        %v352 = vld [vmem:[%s308] sm:$0xf]
        %v353 = vld [vmem:[#allocation8] sm:$0xf]
        %v354 = vld [vmem:[#allocation8 + $0x4] sm:$0xf]
        %v355 = vld [vmem:[#allocation8 + $0x8] sm:$0xf]
        %v356 = vld [vmem:[#allocation8 + $0xc] sm:$0xf]
        %v357 = vld [vmem:[%s3] sm:$0x1]
        %v359 = vlaneseq
        %v360 = vshrl.u32 %v359, 7
        %v361 = vsub.s32 0, %v360
        %v362 = vrot.slane %v357, %v361
        %v368 = vunpack.c.l.b16 %v353
        %v369 = vunpack.c.l.b16 %v354
        %v370 = vunpack.c.l.b16 %v355
        %v371 = vunpack.c.l.b16 %v356
        %v372 = vpack.c.b16 %v369, %v368
        %v373 = vpack.c.b16 %v371, %v370
        %vm376 = vcmask 261120
        %v378 = vsel %vm376, %v351, 0
        %380 = vmatprep.subr.bf16.mxu0 0
        %381 = vmatpush1.bf16.msra.mxu0 0
        %382 = vmatprep.subr.bf16.mxu0 0
        %383 = vmatpush1.bf16.msra.mxu0 0
        %384 = vmatprep.subr.bf16.mxu0 0
        %385 = vmatpush1.bf16.msra.mxu0 0
        %386 = vmatprep.subr.bf16.mxu0 0
        %387 = vmatpush1.bf16.msra.mxu0 0
        %388 = vmatprep.subr.bf16.mxu0 0
        %389 = vmatpush1.bf16.msra.mxu0 0
        %390 = vmatprep.subr.bf16.mxu0 0
        %391 = vmatpush1.bf16.msra.mxu0 0
        %392 = vmatprep.subr.bf16.mxu0 0
        %393 = vmatpush1.bf16.msra.mxu0 %v373
        %394 = vmatprep.subr.bf16.mxu0 0
        %395 = vmatpush1.bf16.msra.mxu0 %v372
        %396 = vmatprep.subr.bf16.mxu0 0
        %397 = vmatpush2.bf16.msra.mxu0 0
        %398 = vmatprep.subr.bf16.mxu0 0
        %399 = vmatpush2.bf16.msra.mxu0 0
        %400 = vmatprep.subr.bf16.mxu0 0
        %401 = vmatpush2.bf16.msra.mxu0 0
        %402 = vmatprep.subr.bf16.mxu0 0
        %403 = vmatpush2.bf16.msra.mxu0 0
        %404 = vmatprep.subr.bf16.mxu0 0
        %405 = vmatpush2.bf16.msra.mxu0 0
        %406 = vmatprep.subr.bf16.mxu0 0
        %407 = vmatpush2.bf16.msra.mxu0 0
        %408 = vmatprep.subr.bf16.mxu0 0
        %409 = vmatpush2.bf16.msra.mxu0 0
        %410 = vmatprep.subr.bf16.mxu0 0
        %411 = vmatpush2.bf16.msra.mxu0 0
        %412 = vmatprep.mubr.bf16.mxu0 0
        %413 = vmatmul.mubr.bf16.gmra.mxu0 %v378
        %v414 = vpop.f32.mrf.mxu0
        %v415 = vadd.f32 %v362, %v414
        %v416 = vpop.f32.mrf.mxu0
        %v417 = vpop.f32.mrf.mxu0
        %v418 = vpop.f32.mrf.mxu0
        %419 = vdwg.mxu0
        %420 = vrot.lane.b32.xlu0 %v372, 96
        %v421 = vpop.permute.xlu0 %420
        %422 = vrot.lane.b32.xlu0 %v373, 96
        %v423 = vpop.permute.xlu0 %422
        %426 = vrot.lane.b32.xlu0 %v362, 96
        %v427 = vpop.permute.xlu0 %426
        %v430 = vsel %vm376, %v352, 0
        %432 = vmatprep.subr.bf16.mxu0 0
        %433 = vmatpush1.bf16.msra.mxu0 0
        %434 = vmatprep.subr.bf16.mxu0 0
        %435 = vmatpush1.bf16.msra.mxu0 0
        %436 = vmatprep.subr.bf16.mxu0 0
        %437 = vmatpush1.bf16.msra.mxu0 0
        %438 = vmatprep.subr.bf16.mxu0 0
        %439 = vmatpush1.bf16.msra.mxu0 0
        %440 = vmatprep.subr.bf16.mxu0 0
        %441 = vmatpush1.bf16.msra.mxu0 0
        %442 = vmatprep.subr.bf16.mxu0 0
        %443 = vmatpush1.bf16.msra.mxu0 0
        %444 = vmatprep.subr.bf16.mxu0 0
        %445 = vmatpush1.bf16.msra.mxu0 %v423
        %446 = vmatprep.subr.bf16.mxu0 0
        %447 = vmatpush1.bf16.msra.mxu0 %v421
        %448 = vmatprep.subr.bf16.mxu0 0
        %449 = vmatpush2.bf16.msra.mxu0 0
        %450 = vmatprep.subr.bf16.mxu0 0
        %451 = vmatpush2.bf16.msra.mxu0 0
        %452 = vmatprep.subr.bf16.mxu0 0
        %453 = vmatpush2.bf16.msra.mxu0 0
        %454 = vmatprep.subr.bf16.mxu0 0
        %455 = vmatpush2.bf16.msra.mxu0 0
        %456 = vmatprep.subr.bf16.mxu0 0
        %457 = vmatpush2.bf16.msra.mxu0 0
        %458 = vmatprep.subr.bf16.mxu0 0
        %459 = vmatpush2.bf16.msra.mxu0 0
        %460 = vmatprep.subr.bf16.mxu0 0
        %461 = vmatpush2.bf16.msra.mxu0 0
        %462 = vmatprep.subr.bf16.mxu0 0
        %463 = vmatpush2.bf16.msra.mxu0 0
        %464 = vmatprep.mubr.bf16.mxu0 0
        %465 = vmatmul.mubr.bf16.gmra.mxu0 %v430
        %v466 = vpop.f32.mrf.mxu0
        %v467 = vadd.f32 %v427, %v466
        %v468 = vpop.f32.mrf.mxu0
        %v469 = vpop.f32.mrf.mxu0
        %v470 = vpop.f32.mrf.mxu0
        %471 = vdwg.mxu0
        %v472 = vlaneseq
        %v473 = vshrl.u32 %v472, 7
        %s474 = smul.u32 %s32, 8
        %v475 = vstv %s474
        %v476 = vadd.s32 %v473, %v475
        %v477 = vlaneseq
        %v478 = vand.u32 %v477, 127
        %vm479 = vcmp.eq.s32.totalorder %v476, %v478
        %vm480 = vcmask 64512
        %v482 = vsel %vm480, %v415, 0
        %v485 = vsel %vm480, %v467, 0
        %487 = vmatprep.subr.mxu0 0.0
        %488 = vmatpush1.xpose.msra.mxu0 0.0
        %489 = vmatprep.subr.mxu0 0.0
        %490 = vmatpush1.xpose.msra.mxu0 0.0
        %491 = vmatprep.subr.mxu0 0.0
        %492 = vmatpush1.xpose.msra.mxu0 0.0
        %493 = vmatprep.subr.mxu0 0.0
        %494 = vmatpush1.xpose.msra.mxu0 0.0
        %495 = vmatprep.subr.mxu0 0.0
        %496 = vmatpush1.xpose.msra.mxu0 0.0
        %497 = vmatprep.subr.mxu0 0.0
        %498 = vmatpush1.xpose.msra.mxu0 0.0
        %499 = vmatprep.subr.mxu0 0.0
        %500 = vmatpush1.xpose.msra.mxu0 0.0
        %501 = vmatprep.subr.mxu0 0.0
        %502 = vmatpush1.xpose.msra.mxu0 0.0
        %503 = vmatprep.subr.mxu0 0.0
        %504 = vmatpush1.xpose.msra.mxu0 0.0
        %505 = vmatprep.subr.mxu0 0.0
        %506 = vmatpush1.xpose.msra.mxu0 0.0
        %507 = vmatprep.subr.mxu0 0.0
        %508 = vmatpush1.xpose.msra.mxu0 0.0
        %509 = vmatprep.subr.mxu0 0.0
        %510 = vmatpush1.xpose.msra.mxu0 0.0
        %511 = vmatprep.subr.mxu0 0.0
        %512 = vmatpush1.xpose.msra.mxu0 0.0
        %513 = vmatprep.subr.mxu0 0.0
        %514 = vmatpush1.xpose.msra.mxu0 0.0
        %515 = vmatprep.subr.mxu0 0.0
        %516 = vmatpush1.xpose.msra.mxu0 0.0
        %517 = vmatprep.subr.mxu0 0.0
        %518 = vmatpush1.xpose.msra.mxu0 %v485
        %519 = vmatprep.subr.mxu0 0.0
        %520 = vmatpush2.xpose.msra.mxu0 0.0
        %521 = vmatprep.subr.mxu0 0.0
        %522 = vmatpush2.xpose.msra.mxu0 0.0
        %523 = vmatprep.subr.mxu0 0.0
        %524 = vmatpush2.xpose.msra.mxu0 0.0
        %525 = vmatprep.subr.mxu0 0.0
        %526 = vmatpush2.xpose.msra.mxu0 0.0
        %527 = vmatprep.subr.mxu0 0.0
        %528 = vmatpush2.xpose.msra.mxu0 0.0
        %529 = vmatprep.subr.mxu0 0.0
        %530 = vmatpush2.xpose.msra.mxu0 0.0
        %531 = vmatprep.subr.mxu0 0.0
        %532 = vmatpush2.xpose.msra.mxu0 0.0
        %533 = vmatprep.subr.mxu0 0.0
        %534 = vmatpush2.xpose.msra.mxu0 0.0
        %535 = vmatprep.subr.mxu0 0.0
        %536 = vmatpush2.xpose.msra.mxu0 0.0
        %537 = vmatprep.subr.mxu0 0.0
        %538 = vmatpush2.xpose.msra.mxu0 0.0
        %539 = vmatprep.subr.mxu0 0.0
        %540 = vmatpush2.xpose.msra.mxu0 0.0
        %541 = vmatprep.subr.mxu0 0.0
        %542 = vmatpush2.xpose.msra.mxu0 0.0
        %543 = vmatprep.subr.mxu0 0.0
        %544 = vmatpush2.xpose.msra.mxu0 0.0
        %545 = vmatprep.subr.mxu0 0.0
        %546 = vmatpush2.xpose.msra.mxu0 0.0
        %547 = vmatprep.subr.mxu0 0.0
        %548 = vmatpush2.xpose.msra.mxu0 0.0
        %549 = vmatprep.subr.mxu0 0.0
        %550 = vmatpush2.xpose.msra.mxu0 0.0
        %551 = vmatprep.mubr.f32.mxu0 0.0
        %552 = vmatmul.mubr.f32.gmra.mxu0 %v482
        %v553 = vpop.f32.mrf.mxu0
        %v554 = vadd.f32 0.0, %v553
        %v555 = vpop.f32.mrf.mxu0
        %556 = vdwg.mxu0
        %v557 = vmul.f32 %v554, 0.35355338
        %v558 = vsel %vm479, 0.0, %v557
        %v559 = vsel %vm480, %v558, -inf
        %560 = vmax.xlane.f32.xlu0 %v559
        %v561 = vpop.xlane.xlu0 %560
        %v562 = vsub.f32 %v558, %v561
        %v563 = vmul.f32 %v562, 1.442695
        %v564 = vpow.pop %v563
        %v565 = vsel %vm480, %v564, 0.0
        %566 = vadd.xlane.f32.xlu0 %v565
        %v567 = vpop.xlane.xlu0 %566
        %v568 = vrcp.pop %v567
        %v569 = vmul.f32 %v564, %v568
        %570 = vrot.lane.b32.xlu0 %v467, 96
        %v571 = vpop.permute.xlu0 %570
        %v574 = vsel %vm480, %v569, 0
        %576 = vmatprep.subr.mxu0 0.0
        %577 = vmatpush1.msra.mxu0 0.0
        %578 = vmatprep.subr.mxu0 0.0
        %579 = vmatpush1.msra.mxu0 0.0
        %580 = vmatprep.subr.mxu0 0.0
        %581 = vmatpush1.msra.mxu0 0.0
        %582 = vmatprep.subr.mxu0 0.0
        %583 = vmatpush1.msra.mxu0 0.0
        %584 = vmatprep.subr.mxu0 0.0
        %585 = vmatpush1.msra.mxu0 0.0
        %586 = vmatprep.subr.mxu0 0.0
        %587 = vmatpush1.msra.mxu0 0.0
        %588 = vmatprep.subr.mxu0 0.0
        %589 = vmatpush1.msra.mxu0 0.0
        %590 = vmatprep.subr.mxu0 0.0
        %591 = vmatpush1.msra.mxu0 0.0
        %592 = vmatprep.subr.mxu0 0.0
        %593 = vmatpush1.msra.mxu0 0.0
        %594 = vmatprep.subr.mxu0 0.0
        %595 = vmatpush1.msra.mxu0 0.0
        %596 = vmatprep.subr.mxu0 0.0
        %597 = vmatpush1.msra.mxu0 0.0
        %598 = vmatprep.subr.mxu0 0.0
        %599 = vmatpush1.msra.mxu0 0.0
        %600 = vmatprep.subr.mxu0 0.0
        %601 = vmatpush1.msra.mxu0 0.0
        %602 = vmatprep.subr.mxu0 0.0
        %603 = vmatpush1.msra.mxu0 0.0
        %604 = vmatprep.subr.mxu0 0.0
        %605 = vmatpush1.msra.mxu0 0.0
        %606 = vmatprep.subr.mxu0 0.0
        %607 = vmatpush1.msra.mxu0 %v571
        %608 = vmatprep.subr.mxu0 0.0
        %609 = vmatpush2.msra.mxu0 0.0
        %610 = vmatprep.subr.mxu0 0.0
        %611 = vmatpush2.msra.mxu0 0.0
        %612 = vmatprep.subr.mxu0 0.0
        %613 = vmatpush2.msra.mxu0 0.0
        %614 = vmatprep.subr.mxu0 0.0
        %615 = vmatpush2.msra.mxu0 0.0
        %616 = vmatprep.subr.mxu0 0.0
        %617 = vmatpush2.msra.mxu0 0.0
        %618 = vmatprep.subr.mxu0 0.0
        %619 = vmatpush2.msra.mxu0 0.0
        %620 = vmatprep.subr.mxu0 0.0
        %621 = vmatpush2.msra.mxu0 0.0
        %622 = vmatprep.subr.mxu0 0.0
        %623 = vmatpush2.msra.mxu0 0.0
        %624 = vmatprep.subr.mxu0 0.0
        %625 = vmatpush2.msra.mxu0 0.0
        %626 = vmatprep.subr.mxu0 0.0
        %627 = vmatpush2.msra.mxu0 0.0
        %628 = vmatprep.subr.mxu0 0.0
        %629 = vmatpush2.msra.mxu0 0.0
        %630 = vmatprep.subr.mxu0 0.0
        %631 = vmatpush2.msra.mxu0 0.0
        %632 = vmatprep.subr.mxu0 0.0
        %633 = vmatpush2.msra.mxu0 0.0
        %634 = vmatprep.subr.mxu0 0.0
        %635 = vmatpush2.msra.mxu0 0.0
        %636 = vmatprep.subr.mxu0 0.0
        %637 = vmatpush2.msra.mxu0 0.0
        %638 = vmatprep.subr.mxu0 0.0
        %639 = vmatpush2.msra.mxu0 0.0
        %640 = vmatprep.mubr.f32.mxu0 0.0
        %641 = vmatmul.mubr.f32.gmra.mxu0 %v574
        %v642 = vpop.f32.mrf.mxu0
        %v643 = vadd.f32 0.0, %v642
        %v644 = vpop.f32.mrf.mxu0
        %645 = vdwg.mxu0
        %646 = vst.msk [vmem:[#allocation2] sm:$0xff] %vm480, %v643
        %647 = vrot.lane.b32.xlu0 %v415, 120
        %v648 = vpop.permute.xlu0 %647
        %649 = vrot.lane.b32.xlu0 %v467, 120
        %v650 = vpop.permute.xlu0 %649
        %v651 = vsel %vm480, %v648, 0
        %v653 = vsel %vm480, %v650, 0
        %655 = vmatprep.subr.mxu0 0.0
        %656 = vmatpush1.xpose.msra.mxu0 0.0
        %657 = vmatprep.subr.mxu0 0.0
        %658 = vmatpush1.xpose.msra.mxu0 0.0
        %659 = vmatprep.subr.mxu0 0.0
        %660 = vmatpush1.xpose.msra.mxu0 0.0
        %661 = vmatprep.subr.mxu0 0.0
        %662 = vmatpush1.xpose.msra.mxu0 0.0
        %663 = vmatprep.subr.mxu0 0.0
        %664 = vmatpush1.xpose.msra.mxu0 0.0
        %665 = vmatprep.subr.mxu0 0.0
        %666 = vmatpush1.xpose.msra.mxu0 0.0
        %667 = vmatprep.subr.mxu0 0.0
        %668 = vmatpush1.xpose.msra.mxu0 0.0
        %669 = vmatprep.subr.mxu0 0.0
        %670 = vmatpush1.xpose.msra.mxu0 0.0
        %671 = vmatprep.subr.mxu0 0.0
        %672 = vmatpush1.xpose.msra.mxu0 0.0
        %673 = vmatprep.subr.mxu0 0.0
        %674 = vmatpush1.xpose.msra.mxu0 0.0
        %675 = vmatprep.subr.mxu0 0.0
        %676 = vmatpush1.xpose.msra.mxu0 0.0
        %677 = vmatprep.subr.mxu0 0.0
        %678 = vmatpush1.xpose.msra.mxu0 0.0
        %679 = vmatprep.subr.mxu0 0.0
        %680 = vmatpush1.xpose.msra.mxu0 0.0
        %681 = vmatprep.subr.mxu0 0.0
        %682 = vmatpush1.xpose.msra.mxu0 0.0
        %683 = vmatprep.subr.mxu0 0.0
        %684 = vmatpush1.xpose.msra.mxu0 0.0
        %685 = vmatprep.subr.mxu0 0.0
        %686 = vmatpush1.xpose.msra.mxu0 %v653
        %687 = vmatprep.subr.mxu0 0.0
        %688 = vmatpush2.xpose.msra.mxu0 0.0
        %689 = vmatprep.subr.mxu0 0.0
        %690 = vmatpush2.xpose.msra.mxu0 0.0
        %691 = vmatprep.subr.mxu0 0.0
        %692 = vmatpush2.xpose.msra.mxu0 0.0
        %693 = vmatprep.subr.mxu0 0.0
        %694 = vmatpush2.xpose.msra.mxu0 0.0
        %695 = vmatprep.subr.mxu0 0.0
        %696 = vmatpush2.xpose.msra.mxu0 0.0
        %697 = vmatprep.subr.mxu0 0.0
        %698 = vmatpush2.xpose.msra.mxu0 0.0
        %699 = vmatprep.subr.mxu0 0.0
        %700 = vmatpush2.xpose.msra.mxu0 0.0
        %701 = vmatprep.subr.mxu0 0.0
        %702 = vmatpush2.xpose.msra.mxu0 0.0
        %703 = vmatprep.subr.mxu0 0.0
        %704 = vmatpush2.xpose.msra.mxu0 0.0
        %705 = vmatprep.subr.mxu0 0.0
        %706 = vmatpush2.xpose.msra.mxu0 0.0
        %707 = vmatprep.subr.mxu0 0.0
        %708 = vmatpush2.xpose.msra.mxu0 0.0
        %709 = vmatprep.subr.mxu0 0.0
        %710 = vmatpush2.xpose.msra.mxu0 0.0
        %711 = vmatprep.subr.mxu0 0.0
        %712 = vmatpush2.xpose.msra.mxu0 0.0
        %713 = vmatprep.subr.mxu0 0.0
        %714 = vmatpush2.xpose.msra.mxu0 0.0
        %715 = vmatprep.subr.mxu0 0.0
        %716 = vmatpush2.xpose.msra.mxu0 0.0
        %717 = vmatprep.subr.mxu0 0.0
        %718 = vmatpush2.xpose.msra.mxu0 0.0
        %719 = vmatprep.mubr.f32.mxu0 0.0
        %720 = vmatmul.mubr.f32.gmra.mxu0 %v651
        %v721 = vpop.f32.mrf.mxu0
        %v722 = vadd.f32 0.0, %v721
        %v723 = vpop.f32.mrf.mxu0
        %724 = vdwg.mxu0
        %v725 = vmul.f32 %v722, 0.35355338
        %v726 = vsel %vm479, 0.0, %v725
        %v727 = vsel %vm480, %v726, -inf
        %728 = vmax.xlane.f32.xlu0 %v727
        %v729 = vpop.xlane.xlu0 %728
        %v730 = vsub.f32 %v726, %v729
        %v731 = vmul.f32 %v730, 1.442695
        %v732 = vpow.pop %v731
        %v733 = vsel %vm480, %v732, 0.0
        %734 = vadd.xlane.f32.xlu0 %v733
        %v735 = vpop.xlane.xlu0 %734
        %v736 = vrcp.pop %v735
        %v737 = vmul.f32 %v732, %v736
        %738 = vrot.lane.b32.xlu0 %v467, 88
        %v739 = vpop.permute.xlu0 %738
        %v742 = vsel %vm480, %v737, 0
        %744 = vmatprep.subr.mxu0 0.0
        %745 = vmatpush1.msra.mxu0 0.0
        %746 = vmatprep.subr.mxu0 0.0
        %747 = vmatpush1.msra.mxu0 0.0
        %748 = vmatprep.subr.mxu0 0.0
        %749 = vmatpush1.msra.mxu0 0.0
        %750 = vmatprep.subr.mxu0 0.0
        %751 = vmatpush1.msra.mxu0 0.0
        %752 = vmatprep.subr.mxu0 0.0
        %753 = vmatpush1.msra.mxu0 0.0
        %754 = vmatprep.subr.mxu0 0.0
        %755 = vmatpush1.msra.mxu0 0.0
        %756 = vmatprep.subr.mxu0 0.0
        %757 = vmatpush1.msra.mxu0 0.0
        %758 = vmatprep.subr.mxu0 0.0
        %759 = vmatpush1.msra.mxu0 0.0
        %760 = vmatprep.subr.mxu0 0.0
        %761 = vmatpush1.msra.mxu0 0.0
        %762 = vmatprep.subr.mxu0 0.0
        %763 = vmatpush1.msra.mxu0 0.0
        %764 = vmatprep.subr.mxu0 0.0
        %765 = vmatpush1.msra.mxu0 0.0
        %766 = vmatprep.subr.mxu0 0.0
        %767 = vmatpush1.msra.mxu0 0.0
        %768 = vmatprep.subr.mxu0 0.0
        %769 = vmatpush1.msra.mxu0 0.0
        %770 = vmatprep.subr.mxu0 0.0
        %771 = vmatpush1.msra.mxu0 0.0
        %772 = vmatprep.subr.mxu0 0.0
        %773 = vmatpush1.msra.mxu0 0.0
        %774 = vmatprep.subr.mxu0 0.0
        %775 = vmatpush1.msra.mxu0 %v739
        %776 = vmatprep.subr.mxu0 0.0
        %777 = vmatpush2.msra.mxu0 0.0
        %778 = vmatprep.subr.mxu0 0.0
        %779 = vmatpush2.msra.mxu0 0.0
        %780 = vmatprep.subr.mxu0 0.0
        %781 = vmatpush2.msra.mxu0 0.0
        %782 = vmatprep.subr.mxu0 0.0
        %783 = vmatpush2.msra.mxu0 0.0
        %784 = vmatprep.subr.mxu0 0.0
        %785 = vmatpush2.msra.mxu0 0.0
        %786 = vmatprep.subr.mxu0 0.0
        %787 = vmatpush2.msra.mxu0 0.0
        %788 = vmatprep.subr.mxu0 0.0
        %789 = vmatpush2.msra.mxu0 0.0
        %790 = vmatprep.subr.mxu0 0.0
        %791 = vmatpush2.msra.mxu0 0.0
        %792 = vmatprep.subr.mxu0 0.0
        %793 = vmatpush2.msra.mxu0 0.0
        %794 = vmatprep.subr.mxu0 0.0
        %795 = vmatpush2.msra.mxu0 0.0
        %796 = vmatprep.subr.mxu0 0.0
        %797 = vmatpush2.msra.mxu0 0.0
        %798 = vmatprep.subr.mxu0 0.0
        %799 = vmatpush2.msra.mxu0 0.0
        %800 = vmatprep.subr.mxu0 0.0
        %801 = vmatpush2.msra.mxu0 0.0
        %802 = vmatprep.subr.mxu0 0.0
        %803 = vmatpush2.msra.mxu0 0.0
        %804 = vmatprep.subr.mxu0 0.0
        %805 = vmatpush2.msra.mxu0 0.0
        %806 = vmatprep.subr.mxu0 0.0
        %807 = vmatpush2.msra.mxu0 0.0
        %808 = vmatprep.mubr.f32.mxu0 0.0
        %809 = vmatmul.mubr.f32.gmra.mxu0 %v742
        %v810 = vpop.f32.mrf.mxu0
        %v811 = vadd.f32 0.0, %v810
        %v812 = vpop.f32.mrf.mxu0
        %813 = vdwg.mxu0
        %815 = vrot.lane.b32.xlu0 %v811, 8
        %v816 = vpop.permute.xlu0 %815
        %vm818 = vcmask 130112
        %819 = vst.msk [vmem:[#allocation2] sm:$0xff] %vm818, %v816
        %820 = vrot.lane.b32.xlu0 %v415, 112
        %v821 = vpop.permute.xlu0 %820
        %822 = vrot.lane.b32.xlu0 %v467, 112
        %v823 = vpop.permute.xlu0 %822
        %v824 = vsel %vm480, %v821, 0
        %v826 = vsel %vm480, %v823, 0
        %828 = vmatprep.subr.mxu0 0.0
        %829 = vmatpush1.xpose.msra.mxu0 0.0
        %830 = vmatprep.subr.mxu0 0.0
        %831 = vmatpush1.xpose.msra.mxu0 0.0
        %832 = vmatprep.subr.mxu0 0.0
        %833 = vmatpush1.xpose.msra.mxu0 0.0
        %834 = vmatprep.subr.mxu0 0.0
        %835 = vmatpush1.xpose.msra.mxu0 0.0
        %836 = vmatprep.subr.mxu0 0.0
        %837 = vmatpush1.xpose.msra.mxu0 0.0
        %838 = vmatprep.subr.mxu0 0.0
        %839 = vmatpush1.xpose.msra.mxu0 0.0
        %840 = vmatprep.subr.mxu0 0.0
        %841 = vmatpush1.xpose.msra.mxu0 0.0
        %842 = vmatprep.subr.mxu0 0.0
        %843 = vmatpush1.xpose.msra.mxu0 0.0
        %844 = vmatprep.subr.mxu0 0.0
        %845 = vmatpush1.xpose.msra.mxu0 0.0
        %846 = vmatprep.subr.mxu0 0.0
        %847 = vmatpush1.xpose.msra.mxu0 0.0
        %848 = vmatprep.subr.mxu0 0.0
        %849 = vmatpush1.xpose.msra.mxu0 0.0
        %850 = vmatprep.subr.mxu0 0.0
        %851 = vmatpush1.xpose.msra.mxu0 0.0
        %852 = vmatprep.subr.mxu0 0.0
        %853 = vmatpush1.xpose.msra.mxu0 0.0
        %854 = vmatprep.subr.mxu0 0.0
        %855 = vmatpush1.xpose.msra.mxu0 0.0
        %856 = vmatprep.subr.mxu0 0.0
        %857 = vmatpush1.xpose.msra.mxu0 0.0
        %858 = vmatprep.subr.mxu0 0.0
        %859 = vmatpush1.xpose.msra.mxu0 %v826
        %860 = vmatprep.subr.mxu0 0.0
        %861 = vmatpush2.xpose.msra.mxu0 0.0
        %862 = vmatprep.subr.mxu0 0.0
        %863 = vmatpush2.xpose.msra.mxu0 0.0
        %864 = vmatprep.subr.mxu0 0.0
        %865 = vmatpush2.xpose.msra.mxu0 0.0
        %866 = vmatprep.subr.mxu0 0.0
        %867 = vmatpush2.xpose.msra.mxu0 0.0
        %868 = vmatprep.subr.mxu0 0.0
        %869 = vmatpush2.xpose.msra.mxu0 0.0
        %870 = vmatprep.subr.mxu0 0.0
        %871 = vmatpush2.xpose.msra.mxu0 0.0
        %872 = vmatprep.subr.mxu0 0.0
        %873 = vmatpush2.xpose.msra.mxu0 0.0
        %874 = vmatprep.subr.mxu0 0.0
        %875 = vmatpush2.xpose.msra.mxu0 0.0
        %876 = vmatprep.subr.mxu0 0.0
        %877 = vmatpush2.xpose.msra.mxu0 0.0
        %878 = vmatprep.subr.mxu0 0.0
        %879 = vmatpush2.xpose.msra.mxu0 0.0
        %880 = vmatprep.subr.mxu0 0.0
        %881 = vmatpush2.xpose.msra.mxu0 0.0
        %882 = vmatprep.subr.mxu0 0.0
        %883 = vmatpush2.xpose.msra.mxu0 0.0
        %884 = vmatprep.subr.mxu0 0.0
        %885 = vmatpush2.xpose.msra.mxu0 0.0
        %886 = vmatprep.subr.mxu0 0.0
        %887 = vmatpush2.xpose.msra.mxu0 0.0
        %888 = vmatprep.subr.mxu0 0.0
        %889 = vmatpush2.xpose.msra.mxu0 0.0
        %890 = vmatprep.subr.mxu0 0.0
        %891 = vmatpush2.xpose.msra.mxu0 0.0
        %892 = vmatprep.mubr.f32.mxu0 0.0
        %893 = vmatmul.mubr.f32.gmra.mxu0 %v824
        %v894 = vpop.f32.mrf.mxu0
        %v895 = vadd.f32 0.0, %v894
        %v896 = vpop.f32.mrf.mxu0
        %897 = vdwg.mxu0
        %v898 = vmul.f32 %v895, 0.35355338
        %v899 = vsel %vm479, 0.0, %v898
        %v900 = vsel %vm480, %v899, -inf
        %901 = vmax.xlane.f32.xlu0 %v900
        %v902 = vpop.xlane.xlu0 %901
        %v903 = vsub.f32 %v899, %v902
        %v904 = vmul.f32 %v903, 1.442695
        %v905 = vpow.pop %v904
        %v906 = vsel %vm480, %v905, 0.0
        %907 = vadd.xlane.f32.xlu0 %v906
        %v908 = vpop.xlane.xlu0 %907
        %v909 = vrcp.pop %v908
        %v910 = vmul.f32 %v905, %v909
        %911 = vrot.lane.b32.xlu0 %v467, 80
        %v912 = vpop.permute.xlu0 %911
        %v915 = vsel %vm480, %v910, 0
        %917 = vmatprep.subr.mxu0 0.0
        %918 = vmatpush1.msra.mxu0 0.0
        %919 = vmatprep.subr.mxu0 0.0
        %920 = vmatpush1.msra.mxu0 0.0
        %921 = vmatprep.subr.mxu0 0.0
        %922 = vmatpush1.msra.mxu0 0.0
        %923 = vmatprep.subr.mxu0 0.0
        %924 = vmatpush1.msra.mxu0 0.0
        %925 = vmatprep.subr.mxu0 0.0
        %926 = vmatpush1.msra.mxu0 0.0
        %927 = vmatprep.subr.mxu0 0.0
        %928 = vmatpush1.msra.mxu0 0.0
        %929 = vmatprep.subr.mxu0 0.0
        %930 = vmatpush1.msra.mxu0 0.0
        %931 = vmatprep.subr.mxu0 0.0
        %932 = vmatpush1.msra.mxu0 0.0
        %933 = vmatprep.subr.mxu0 0.0
        %934 = vmatpush1.msra.mxu0 0.0
        %935 = vmatprep.subr.mxu0 0.0
        %936 = vmatpush1.msra.mxu0 0.0
        %937 = vmatprep.subr.mxu0 0.0
        %938 = vmatpush1.msra.mxu0 0.0
        %939 = vmatprep.subr.mxu0 0.0
        %940 = vmatpush1.msra.mxu0 0.0
        %941 = vmatprep.subr.mxu0 0.0
        %942 = vmatpush1.msra.mxu0 0.0
        %943 = vmatprep.subr.mxu0 0.0
        %944 = vmatpush1.msra.mxu0 0.0
        %945 = vmatprep.subr.mxu0 0.0
        %946 = vmatpush1.msra.mxu0 0.0
        %947 = vmatprep.subr.mxu0 0.0
        %948 = vmatpush1.msra.mxu0 %v912
        %949 = vmatprep.subr.mxu0 0.0
        %950 = vmatpush2.msra.mxu0 0.0
        %951 = vmatprep.subr.mxu0 0.0
        %952 = vmatpush2.msra.mxu0 0.0
        %953 = vmatprep.subr.mxu0 0.0
        %954 = vmatpush2.msra.mxu0 0.0
        %955 = vmatprep.subr.mxu0 0.0
        %956 = vmatpush2.msra.mxu0 0.0
        %957 = vmatprep.subr.mxu0 0.0
        %958 = vmatpush2.msra.mxu0 0.0
        %959 = vmatprep.subr.mxu0 0.0
        %960 = vmatpush2.msra.mxu0 0.0
        %961 = vmatprep.subr.mxu0 0.0
        %962 = vmatpush2.msra.mxu0 0.0
        %963 = vmatprep.subr.mxu0 0.0
        %964 = vmatpush2.msra.mxu0 0.0
        %965 = vmatprep.subr.mxu0 0.0
        %966 = vmatpush2.msra.mxu0 0.0
        %967 = vmatprep.subr.mxu0 0.0
        %968 = vmatpush2.msra.mxu0 0.0
        %969 = vmatprep.subr.mxu0 0.0
        %970 = vmatpush2.msra.mxu0 0.0
        %971 = vmatprep.subr.mxu0 0.0
        %972 = vmatpush2.msra.mxu0 0.0
        %973 = vmatprep.subr.mxu0 0.0
        %974 = vmatpush2.msra.mxu0 0.0
        %975 = vmatprep.subr.mxu0 0.0
        %976 = vmatpush2.msra.mxu0 0.0
        %977 = vmatprep.subr.mxu0 0.0
        %978 = vmatpush2.msra.mxu0 0.0
        %979 = vmatprep.subr.mxu0 0.0
        %980 = vmatpush2.msra.mxu0 0.0
        %981 = vmatprep.mubr.f32.mxu0 0.0
        %982 = vmatmul.mubr.f32.gmra.mxu0 %v915
        %v983 = vpop.f32.mrf.mxu0
        %v984 = vadd.f32 0.0, %v983
        %v985 = vpop.f32.mrf.mxu0
        %986 = vdwg.mxu0
        %988 = vrot.lane.b32.xlu0 %v984, 16
        %v989 = vpop.permute.xlu0 %988
        %vm991 = vcmask 195712
        %992 = vst.msk [vmem:[#allocation2] sm:$0xff] %vm991, %v989
        %993 = vrot.lane.b32.xlu0 %v415, 104
        %v994 = vpop.permute.xlu0 %993
        %995 = vrot.lane.b32.xlu0 %v467, 104
        %v996 = vpop.permute.xlu0 %995
        %v997 = vsel %vm480, %v994, 0
        %v999 = vsel %vm480, %v996, 0
        %1001 = vmatprep.subr.mxu0 0.0
        %1002 = vmatpush1.xpose.msra.mxu0 0.0
        %1003 = vmatprep.subr.mxu0 0.0
        %1004 = vmatpush1.xpose.msra.mxu0 0.0
        %1005 = vmatprep.subr.mxu0 0.0
        %1006 = vmatpush1.xpose.msra.mxu0 0.0
        %1007 = vmatprep.subr.mxu0 0.0
        %1008 = vmatpush1.xpose.msra.mxu0 0.0
        %1009 = vmatprep.subr.mxu0 0.0
        %1010 = vmatpush1.xpose.msra.mxu0 0.0
        %1011 = vmatprep.subr.mxu0 0.0
        %1012 = vmatpush1.xpose.msra.mxu0 0.0
        %1013 = vmatprep.subr.mxu0 0.0
        %1014 = vmatpush1.xpose.msra.mxu0 0.0
        %1015 = vmatprep.subr.mxu0 0.0
        %1016 = vmatpush1.xpose.msra.mxu0 0.0
        %1017 = vmatprep.subr.mxu0 0.0
        %1018 = vmatpush1.xpose.msra.mxu0 0.0
        %1019 = vmatprep.subr.mxu0 0.0
        %1020 = vmatpush1.xpose.msra.mxu0 0.0
        %1021 = vmatprep.subr.mxu0 0.0
        %1022 = vmatpush1.xpose.msra.mxu0 0.0
        %1023 = vmatprep.subr.mxu0 0.0
        %1024 = vmatpush1.xpose.msra.mxu0 0.0
        %1025 = vmatprep.subr.mxu0 0.0
        %1026 = vmatpush1.xpose.msra.mxu0 0.0
        %1027 = vmatprep.subr.mxu0 0.0
        %1028 = vmatpush1.xpose.msra.mxu0 0.0
        %1029 = vmatprep.subr.mxu0 0.0
        %1030 = vmatpush1.xpose.msra.mxu0 0.0
        %1031 = vmatprep.subr.mxu0 0.0
        %1032 = vmatpush1.xpose.msra.mxu0 %v999
        %1033 = vmatprep.subr.mxu0 0.0
        %1034 = vmatpush2.xpose.msra.mxu0 0.0
        %1035 = vmatprep.subr.mxu0 0.0
        %1036 = vmatpush2.xpose.msra.mxu0 0.0
        %1037 = vmatprep.subr.mxu0 0.0
        %1038 = vmatpush2.xpose.msra.mxu0 0.0
        %1039 = vmatprep.subr.mxu0 0.0
        %1040 = vmatpush2.xpose.msra.mxu0 0.0
        %1041 = vmatprep.subr.mxu0 0.0
        %1042 = vmatpush2.xpose.msra.mxu0 0.0
        %1043 = vmatprep.subr.mxu0 0.0
        %1044 = vmatpush2.xpose.msra.mxu0 0.0
        %1045 = vmatprep.subr.mxu0 0.0
        %1046 = vmatpush2.xpose.msra.mxu0 0.0
        %1047 = vmatprep.subr.mxu0 0.0
        %1048 = vmatpush2.xpose.msra.mxu0 0.0
        %1049 = vmatprep.subr.mxu0 0.0
        %1050 = vmatpush2.xpose.msra.mxu0 0.0
        %1051 = vmatprep.subr.mxu0 0.0
        %1052 = vmatpush2.xpose.msra.mxu0 0.0
        %1053 = vmatprep.subr.mxu0 0.0
        %1054 = vmatpush2.xpose.msra.mxu0 0.0
        %1055 = vmatprep.subr.mxu0 0.0
        %1056 = vmatpush2.xpose.msra.mxu0 0.0
        %1057 = vmatprep.subr.mxu0 0.0
        %1058 = vmatpush2.xpose.msra.mxu0 0.0
        %1059 = vmatprep.subr.mxu0 0.0
        %1060 = vmatpush2.xpose.msra.mxu0 0.0
        %1061 = vmatprep.subr.mxu0 0.0
        %1062 = vmatpush2.xpose.msra.mxu0 0.0
        %1063 = vmatprep.subr.mxu0 0.0
        %1064 = vmatpush2.xpose.msra.mxu0 0.0
        %1065 = vmatprep.mubr.f32.mxu0 0.0
        %1066 = vmatmul.mubr.f32.gmra.mxu0 %v997
        %v1067 = vpop.f32.mrf.mxu0
        %v1068 = vadd.f32 0.0, %v1067
        %v1069 = vpop.f32.mrf.mxu0
        %1070 = vdwg.mxu0
        %v1071 = vmul.f32 %v1068, 0.35355338
        %v1072 = vsel %vm479, 0.0, %v1071
        %v1073 = vsel %vm480, %v1072, -inf
        %1074 = vmax.xlane.f32.xlu0 %v1073
        %v1075 = vpop.xlane.xlu0 %1074
        %v1076 = vsub.f32 %v1072, %v1075
        %v1077 = vmul.f32 %v1076, 1.442695
        %v1078 = vpow.pop %v1077
        %v1079 = vsel %vm480, %v1078, 0.0
        %1080 = vadd.xlane.f32.xlu0 %v1079
        %v1081 = vpop.xlane.xlu0 %1080
        %v1082 = vrcp.pop %v1081
        %v1083 = vmul.f32 %v1078, %v1082
        %1084 = vrot.lane.b32.xlu0 %v467, 72
        %v1085 = vpop.permute.xlu0 %1084
        %v1088 = vsel %vm480, %v1083, 0
        %1090 = vmatprep.subr.mxu0 0.0
        %1091 = vmatpush1.msra.mxu0 0.0
        %1092 = vmatprep.subr.mxu0 0.0
        %1093 = vmatpush1.msra.mxu0 0.0
        %1094 = vmatprep.subr.mxu0 0.0
        %1095 = vmatpush1.msra.mxu0 0.0
        %1096 = vmatprep.subr.mxu0 0.0
        %1097 = vmatpush1.msra.mxu0 0.0
        %1098 = vmatprep.subr.mxu0 0.0
        %1099 = vmatpush1.msra.mxu0 0.0
        %1100 = vmatprep.subr.mxu0 0.0
        %1101 = vmatpush1.msra.mxu0 0.0
        %1102 = vmatprep.subr.mxu0 0.0
        %1103 = vmatpush1.msra.mxu0 0.0
        %1104 = vmatprep.subr.mxu0 0.0
        %1105 = vmatpush1.msra.mxu0 0.0
        %1106 = vmatprep.subr.mxu0 0.0
        %1107 = vmatpush1.msra.mxu0 0.0
        %1108 = vmatprep.subr.mxu0 0.0
        %1109 = vmatpush1.msra.mxu0 0.0
        %1110 = vmatprep.subr.mxu0 0.0
        %1111 = vmatpush1.msra.mxu0 0.0
        %1112 = vmatprep.subr.mxu0 0.0
        %1113 = vmatpush1.msra.mxu0 0.0
        %1114 = vmatprep.subr.mxu0 0.0
        %1115 = vmatpush1.msra.mxu0 0.0
        %1116 = vmatprep.subr.mxu0 0.0
        %1117 = vmatpush1.msra.mxu0 0.0
        %1118 = vmatprep.subr.mxu0 0.0
        %1119 = vmatpush1.msra.mxu0 0.0
        %1120 = vmatprep.subr.mxu0 0.0
        %1121 = vmatpush1.msra.mxu0 %v1085
        %1122 = vmatprep.subr.mxu0 0.0
        %1123 = vmatpush2.msra.mxu0 0.0
        %1124 = vmatprep.subr.mxu0 0.0
        %1125 = vmatpush2.msra.mxu0 0.0
        %1126 = vmatprep.subr.mxu0 0.0
        %1127 = vmatpush2.msra.mxu0 0.0
        %1128 = vmatprep.subr.mxu0 0.0
        %1129 = vmatpush2.msra.mxu0 0.0
        %1130 = vmatprep.subr.mxu0 0.0
        %1131 = vmatpush2.msra.mxu0 0.0
        %1132 = vmatprep.subr.mxu0 0.0
        %1133 = vmatpush2.msra.mxu0 0.0
        %1134 = vmatprep.subr.mxu0 0.0
        %1135 = vmatpush2.msra.mxu0 0.0
        %1136 = vmatprep.subr.mxu0 0.0
        %1137 = vmatpush2.msra.mxu0 0.0
        %1138 = vmatprep.subr.mxu0 0.0
        %1139 = vmatpush2.msra.mxu0 0.0
        %1140 = vmatprep.subr.mxu0 0.0
        %1141 = vmatpush2.msra.mxu0 0.0
        %1142 = vmatprep.subr.mxu0 0.0
        %1143 = vmatpush2.msra.mxu0 0.0
        %1144 = vmatprep.subr.mxu0 0.0
        %1145 = vmatpush2.msra.mxu0 0.0
        %1146 = vmatprep.subr.mxu0 0.0
        %1147 = vmatpush2.msra.mxu0 0.0
        %1148 = vmatprep.subr.mxu0 0.0
        %1149 = vmatpush2.msra.mxu0 0.0
        %1150 = vmatprep.subr.mxu0 0.0
        %1151 = vmatpush2.msra.mxu0 0.0
        %1152 = vmatprep.subr.mxu0 0.0
        %1153 = vmatpush2.msra.mxu0 0.0
        %1154 = vmatprep.mubr.f32.mxu0 0.0
        %1155 = vmatmul.mubr.f32.gmra.mxu0 %v1088
        %v1156 = vpop.f32.mrf.mxu0
        %v1157 = vadd.f32 0.0, %v1156
        %v1158 = vpop.f32.mrf.mxu0
        %1159 = vdwg.mxu0
        %1161 = vrot.lane.b32.xlu0 %v1157, 24
        %v1162 = vpop.permute.xlu0 %1161
        %vm1164 = vcmask 261312
        %1165 = vst.msk [vmem:[#allocation2] sm:$0xff] %vm1164, %v1162
        %v1166 = vld [vmem:[#allocation2] sm:$0xff]
        %v1167 = vpack.c.bf16 %v1166, %v1166
        %v1168 = vld [vmem:[#allocation9] sm:$0xf]
        %v1169 = vld [vmem:[#allocation9 + $0x4] sm:$0xf]
        %v1170 = vld [vmem:[#allocation9 + $0x8] sm:$0xf]
        %v1171 = vld [vmem:[#allocation9 + $0xc] sm:$0xf]
        %v1172 = vld [vmem:[%s5] sm:$0x1]
        %v1174 = vlaneseq
        %v1175 = vshrl.u32 %v1174, 7
        %v1176 = vsub.s32 0, %v1175
        %v1177 = vrot.slane %v1172, %v1176
        %v1183 = vunpack.c.l.b16 %v1168
        %v1184 = vunpack.c.l.b16 %v1169
        %v1185 = vunpack.c.l.b16 %v1170
        %v1186 = vunpack.c.l.b16 %v1171
        %v1187 = vpack.c.b16 %v1184, %v1183
        %v1188 = vpack.c.b16 %v1186, %v1185
        %v1192 = vsel %vm376, %v1167, 0
        %1194 = vmatprep.subr.bf16.mxu0 0
        %1195 = vmatpush1.bf16.msra.mxu0 0
        %1196 = vmatprep.subr.bf16.mxu0 0
        %1197 = vmatpush1.bf16.msra.mxu0 0
        %1198 = vmatprep.subr.bf16.mxu0 0
        %1199 = vmatpush1.bf16.msra.mxu0 0
        %1200 = vmatprep.subr.bf16.mxu0 0
        %1201 = vmatpush1.bf16.msra.mxu0 0
        %1202 = vmatprep.subr.bf16.mxu0 0
        %1203 = vmatpush1.bf16.msra.mxu0 0
        %1204 = vmatprep.subr.bf16.mxu0 0
        %1205 = vmatpush1.bf16.msra.mxu0 0
        %1206 = vmatprep.subr.bf16.mxu0 0
        %1207 = vmatpush1.bf16.msra.mxu0 %v1188
        %1208 = vmatprep.subr.bf16.mxu0 0
        %1209 = vmatpush1.bf16.msra.mxu0 %v1187
        %1210 = vmatprep.subr.bf16.mxu0 0
        %1211 = vmatpush2.bf16.msra.mxu0 0
        %1212 = vmatprep.subr.bf16.mxu0 0
        %1213 = vmatpush2.bf16.msra.mxu0 0
        %1214 = vmatprep.subr.bf16.mxu0 0
        %1215 = vmatpush2.bf16.msra.mxu0 0
        %1216 = vmatprep.subr.bf16.mxu0 0
        %1217 = vmatpush2.bf16.msra.mxu0 0
        %1218 = vmatprep.subr.bf16.mxu0 0
        %1219 = vmatpush2.bf16.msra.mxu0 0
        %1220 = vmatprep.subr.bf16.mxu0 0
        %1221 = vmatpush2.bf16.msra.mxu0 0
        %1222 = vmatprep.subr.bf16.mxu0 0
        %1223 = vmatpush2.bf16.msra.mxu0 0
        %1224 = vmatprep.subr.bf16.mxu0 0
        %1225 = vmatpush2.bf16.msra.mxu0 0
        %1226 = vmatprep.mubr.bf16.mxu0 0
        %1227 = vmatmul.mubr.bf16.gmra.mxu0 %v1192
        %v1228 = vpop.f32.mrf.mxu0
        %v1229 = vadd.f32 %v1177, %v1228
        %v1230 = vpop.f32.mrf.mxu0
        %v1231 = vpop.f32.mrf.mxu0
        %v1232 = vpop.f32.mrf.mxu0
        %1233 = vdwg.mxu0
        %1234 = vst.msk [vmem:[%s349] sm:$0xff] %vm376, %v1229
        %s1235 = sand.u32 %s187, 1
        %s1236 = scalar_lea.sflag [#allocation5], %s1235
        %s1237 = sand.u32 %s187, 1
        %s1238 = smul.addr %s1237, 8
        %s1239 = scalar_lea.vmem [#allocation11], %s1238
        // Predicated region
        $region61: #{tpu_custom_call.1} parent=43 // pred_check
          %p1240 = pneg %p197
        $region62: #{tpu_custom_call.1} parent=43 // pred_check_branch
          %1242 = sbr.rel (%p1240) target = $region64
        $region63: #{tpu_custom_call.1} parent=43 // pred_region
          %s1244 = ssub.s32 128, 128
          %1245 = vsyncadd %s1236, %s1244
          %s1246 = sadd.s32 %s32, %s31
          %s1247 = smul.addr %s1246, 128
          %s1248 = scalar_lea.hbm %s6, %s1247
          %s1250 = sshll.u32 %s1239, 4
          %s1251 = int_to_ptr.vmem [resolvable:$true] %s1250
          %1253 = dma.vmem_to_hbm [thread:$0]  %s1251, 128, %s1248, %s1236
        $region64: #{tpu_custom_call.1} parent=43 // pred_fallthru
          _
      $region44: #{tpu_custom_call.1} parent=5 // pred_fallthru
        _
      %p1254 = scmp.le.s32.totalorder 2, %s22
      // Predicated region
      $region65: #{tpu_custom_call.1} parent=5 // pred_check
        %p1255 = pneg %p1254
      $region66: #{tpu_custom_call.1} parent=5 // pred_check_branch
        %1257 = sbr.rel (%p1255) target = $region68
      $region67: #{tpu_custom_call.1} parent=5 // pred_region
        %s1258 = ssub.s32 %s22, 2
        // Predicated region
        $region69: #{tpu_custom_call.1} parent=67 // pred_check
          %p1259 = pneg %p203
        $region70: #{tpu_custom_call.1} parent=67 // pred_check_branch
          %1261 = sbr.rel (%p1259) target = $region72
        $region71: #{tpu_custom_call.1} parent=67 // pred_region
          %s1262 = sand.u32 %s188, 1
          %s1263 = scalar_lea.sflag [#allocation5], %s1262
          %s1264 = sand.u32 %s188, 1
          %s1265 = smul.addr %s1264, 8
          %s1266 = scalar_lea.vmem [#allocation11], %s1265
          %1267 = dma.done %s1263, 128
        $region72: #{tpu_custom_call.1} parent=67 // pred_fallthru
          _
      $region68: #{tpu_custom_call.1} parent=5 // pred_fallthru
        _
    $region6: #{tpu_custom_call.1} parent=1 // loop_footer
      %s26 = sadd.s32 1, %s22
    $region7: #{tpu_custom_call.1} parent=1 // loop_footer_branch
      %21 = sbr.rel target = $region3
    $region8: #{tpu_custom_call.1} parent=1 // loop_exit
      _
    %1268 = vsyncpa [#allocation4], 1
    %s1269 = scalar_lea.sflag [#allocation4], 1
    %1270 = vsyncpa %s1269, 1
    %1271 = vsyncpa [#allocation7], 1
    %s1272 = scalar_lea.sflag [#allocation7], 1
    %1273 = vsyncpa %s1272, 1
    %1274 = vsyncpa [#allocation10], 1
    %1275 = vsyncpa [#allocation5], 1
    %s1276 = scalar_lea.sflag [#allocation5], 1
    %1277 = vsyncpa %s1276, 1

</llo_original>
